<compile_context>
chip_gen: v7x
topology: tpu7x:2x2x1
jax: 0.10.0
libtpu: 0.0.40
codegen_flags: <defaults>
</compile_context>

<pallas_src>
import jax
import jax.numpy as jnp
from jax.experimental import pallas as pl
from jax.experimental.pallas import tpu as pltpu

# ---- problem constants (from the module) ------------------------------------
T = 100
BETA_1 = 1e-4
BETA_T = 0.02
DROP_PROB = 0.1
IMG = 28 * 28            # 784 (module hard-codes the 28x28 reshape)
NUM_CLASSES = 10
HIDDEN = 256

ROW_ALIGN = 16           # bf16 sublane packing
TB_MAX = 512             # per review: cap tile rows at 512 on every generation
COND_W = 16              # merged conditioning/coefficient table width


def _round_up(x, m):
    return ((x + m - 1) // m) * m


def _cdiv(a, b):
    return -(-a // b)


def _pick_tb(B):
    """Tile rows: minimal padding, <=512 rows, >=2 tiles for large batches."""
    if B <= 256:
        return _round_up(B, ROW_ALIGN)
    n_tiles = max(2, _cdiv(B, TB_MAX))
    return _round_up(_cdiv(B, n_tiles), ROW_ALIGN)


# ---- fused Pallas kernel: noising + MLP denoiser + partial MSE ---------------
def ddpm_loss_kernel(x0_ref, eps_ref, cond_ref, w1_ref, wc_ref, w2_ref, b2_ref,
                     part_ref):
    # bf16 storage for the two big streams; upcast -> ALL math stays f32 on VPU
    x0 = x0_ref[...].astype(jnp.float32)       # (TB, IMG)
    eps = eps_ref[...].astype(jnp.float32)     # (TB, IMG)

    cond = cond_ref[...]                       # (TB, 16) f32:
    # [onehot(c)(0:10), t/T(10), 1(11), sqrt_ab(12), sqrt_1mab(13), mask(14), 0(15)]
    sa = cond[:, 12:13]
    sb = cond[:, 13:14]
    mask = cond[:, 14:15]

    # diffusion noising (f32, VPU): xt = sqrt(ab)*x0 + sqrt(1-ab)*eps
    xt = sa * x0 + sb * eps

    # GEMM 1 (MXU, bf16 in / f32 acc): xt @ W1 + cond @ [Wc; Wt; b1; 0]
    h = jnp.dot(xt.astype(jnp.bfloat16), w1_ref[...],
                preferred_element_type=jnp.float32)
    h = h + jnp.dot(cond.astype(jnp.bfloat16), wc_ref[...],
                    preferred_element_type=jnp.float32)
    h = jnp.maximum(h, 0.0)

    # GEMM 2 (MXU, bf16 in / f32 acc) + f32 bias
    out = jnp.dot(h.astype(jnp.bfloat16), w2_ref[...],
                  preferred_element_type=jnp.float32)
    out = out + b2_ref[...]

    diff = eps - out
    last = pl.num_programs(0) - 1

    # Full tiles: unmasked partial sum over rows (lane-dense (1, IMG) store).
    @pl.when(pl.program_id(0) != last)
    def _():
        part_ref[...] = jnp.sum(diff * diff, axis=0, keepdims=True)

    # Last (possibly ragged) tile: zero out padded batch rows via the row mask.
    @pl.when(pl.program_id(0) == last)
    def _():
        d = diff * mask
        part_ref[...] = jnp.sum(d * d, axis=0, keepdims=True)


def ddpm_forward_loss(x0, eps, sqrt_ab, sqrt_1mab, t_norm, c_onehot, params,
                      *, tb=None):
    """Wrapper: minimal batch padding, bf16 streams, batch-tiled grid."""
    w1, wt, wc, b1, w2, b2 = params
    B, img = x0.shape
    nc = c_onehot.shape[1]
    hidden = w1.shape[1]

    if tb is None:
        tb = _pick_tb(B)
    bp = _round_up(B, tb)
    n_tiles = bp // tb

    # Big per-example streams at bf16 (no feature padding -- 784 is the full
    # last dim of both the array and the block, which is legal).
    x0_b = x0.astype(jnp.bfloat16)
    eps_b = eps.astype(jnp.bfloat16)
    if bp != B:
        x0_b = jnp.pad(x0_b, ((0, bp - B), (0, 0)))
        eps_b = jnp.pad(eps_b, ((0, bp - B), (0, 0)))

    # Merged per-row conditioning / coefficient table (tiny, f32):
    # [onehot(c), t/T, 1, sqrt_ab, sqrt_1mab, row_mask, 0]
    ones = jnp.ones((B, 1), jnp.float32)
    cond = jnp.concatenate(
        [c_onehot, t_norm, ones, sqrt_ab, sqrt_1mab, ones], axis=1)
    cond = jnp.pad(cond, ((0, bp - B), (0, COND_W - cond.shape[1])))

    # bf16 weights (halve the weight DMA); fused conditioning weight stacks
    # [Wc; Wt; b1; zeros] so its K matches cond's 16 columns.
    w1_b = w1.astype(jnp.bfloat16)
    wc_aug = jnp.concatenate(
        [wc, wt, b1, jnp.zeros((COND_W - (nc + 2), hidden), jnp.float32)],
        axis=0).astype(jnp.bfloat16)
    w2_b = w2.astype(jnp.bfloat16)
    # b2 stays f32, added after the f32-accumulated GEMM.

    def stream_spec(shape):
        # Deepen the pipeline on the two big streams when there are enough
        # grid steps for a 3rd buffer to help.
        if n_tiles >= 3:
            return pl.BlockSpec(shape, lambda i: (i, 0),
                                pipeline_mode=pl.Buffered(3))
        return pl.BlockSpec(shape, lambda i: (i, 0))

    def batch_spec(shape):
        return pl.BlockSpec(shape, lambda i: (i, 0))

    def const_spec(shape):
        return pl.BlockSpec(shape, lambda i: (0, 0))

    partials = pl.pallas_call(
        ddpm_loss_kernel,
        out_shape=jax.ShapeDtypeStruct((n_tiles, img), jnp.float32),
        grid=(n_tiles,),
        in_specs=[
            stream_spec((tb, img)),        # x0   (bf16)
            stream_spec((tb, img)),        # eps  (bf16)
            batch_spec((tb, COND_W)),      # merged cond/coef table (f32)
            const_spec((img, hidden)),     # W1   (bf16, VMEM-resident)
            const_spec((COND_W, hidden)),  # [Wc; Wt; b1; 0] (bf16)
            const_spec((hidden, img)),     # W2   (bf16)
            const_spec((1, img)),          # b2   (f32)
        ],
        out_specs=pl.BlockSpec((1, img), lambda i: (i, 0)),
        compiler_params=pltpu.CompilerParams(
            dimension_semantics=("parallel",),
            vmem_limit_bytes=48 * 1024 * 1024),
    )(x0_b, eps_b, cond, w1_b, wc_aug, w2_b, b2)

    # mean over the TRUE element count (B * 784), not the padded shapes
    return jnp.sum(partials) * (1.0 / (B * img))


# ---- plain-JAX reference (same bf16-storage / f32-accumulate numerics) -------
def ddpm_forward_loss_ref(x0, eps, sqrt_ab, sqrt_1mab, t_norm, c_onehot, params):
    w1, wt, wc, b1, w2, b2 = params
    x0 = x0.astype(jnp.float32)
    eps = eps.astype(jnp.float32)
    xt = sqrt_ab * x0 + sqrt_1mab * eps
    c_aug = jnp.concatenate([c_onehot, t_norm, jnp.ones_like(t_norm)], axis=1)
    wc_aug = jnp.concatenate([wc, wt, b1], axis=0)
    h = jnp.dot(xt.astype(jnp.bfloat16), w1.astype(jnp.bfloat16),
                preferred_element_type=jnp.float32)
    h = h + jnp.dot(c_aug.astype(jnp.bfloat16), wc_aug.astype(jnp.bfloat16),
                    preferred_element_type=jnp.float32)
    h = jnp.maximum(h, 0.0)
    out = jnp.dot(h.astype(jnp.bfloat16), w2.astype(jnp.bfloat16),
                  preferred_element_type=jnp.float32) + b2
    return jnp.mean((eps - out) ** 2)


if __name__ == "__main__":
    B = 2
    key = jax.random.PRNGKey(0)
    (k_x0, k_eps, k_t, k_c, k_drop,
     k_w1, k_wt, k_wc, k_w2) = jax.random.split(key, 9)

    # ---- diffusion schedule buffers (glue, plain JAX) ----
    beta = jnp.linspace(BETA_1, BETA_T, T + 1, dtype=jnp.float32)
    alpha = 1.0 - beta
    alpha_bar = jnp.cumprod(alpha, axis=0)

    # ---- inputs ----
    x0 = jax.random.normal(k_x0, (B, IMG), dtype=jnp.float32)   # flat MNIST-like
    c = jax.random.randint(k_c, (B,), 0, NUM_CLASSES)

    # t ~ randint(1, T) per batch element; epsilon ~ N(0,1)
    t = jax.random.randint(k_t, (B, 1), 1, T)
    eps = jax.random.normal(k_eps, (B, IMG), dtype=jnp.float32)

    sqrt_ab = jnp.sqrt(alpha_bar[t[:, 0]])[:, None]              # (B, 1)
    sqrt_1mab = jnp.sqrt(1.0 - alpha_bar[t[:, 0]])[:, None]      # (B, 1)
    t_norm = t.astype(jnp.float32) / T                           # (B, 1)

    # classifier-free guidance drop: single Bernoulli for the whole batch,
    # exactly like the module's `if random.random() < self.drop_prob: c = None`
    # (unconditional is represented as an all-zero class embedding).
    drop = jax.random.uniform(k_drop, ()) < DROP_PROB
    c_onehot = jax.nn.one_hot(c, NUM_CLASSES, dtype=jnp.float32)
    c_onehot = jnp.where(drop, jnp.zeros_like(c_onehot), c_onehot)

    # ---- deterministic synthetic network parameters ----
    w1 = jax.random.normal(k_w1, (IMG, HIDDEN), jnp.float32) * (1.0 / IMG ** 0.5)
    wt = jax.random.normal(k_wt, (1, HIDDEN), jnp.float32) * 0.1
    wc = jax.random.normal(k_wc, (NUM_CLASSES, HIDDEN), jnp.float32) * 0.1
    b1 = jnp.zeros((1, HIDDEN), jnp.float32)
    w2 = jax.random.normal(k_w2, (HIDDEN, IMG), jnp.float32) * (1.0 / HIDDEN ** 0.5)
    b2 = jnp.zeros((1, IMG), jnp.float32)
    params = (w1, wt, wc, b1, w2, b2)

    # Stream the two big per-example tensors at bf16 (halves HBM traffic into
    # the kernel); the reference consumes the same bf16-quantized values so the
    # comparison isolates kernel numerics.  All arithmetic stays f32.
    x0_b = x0.astype(jnp.bfloat16)
    eps_b = eps.astype(jnp.bfloat16)

    # ---- run kernel ----
    loss = ddpm_forward_loss(x0_b, eps_b, sqrt_ab, sqrt_1mab, t_norm,
                             c_onehot, params)
    loss = jax.block_until_ready(loss)

    loss_ref = ddpm_forward_loss_ref(x0_b, eps_b, sqrt_ab, sqrt_1mab, t_norm,
                                     c_onehot, params)
    assert jnp.allclose(loss, loss_ref, rtol=2e-2, atol=1e-3), (loss, loss_ref)

    print("KERNEL_OK")
</pallas_src>

<mosaic_0001>
module attributes {stable_mosaic.version = 11 : i64} {
  func.func @ddpm_loss_kernel(%arg0: i32, %arg1: memref<16x784xbf16, #tpu.memory_space<vmem>>, %arg2: memref<16x784xbf16, #tpu.memory_space<vmem>>, %arg3: memref<16x16xf32, #tpu.memory_space<vmem>>, %arg4: memref<784x256xbf16, #tpu.memory_space<vmem>>, %arg5: memref<16x256xbf16, #tpu.memory_space<vmem>>, %arg6: memref<256x784xbf16, #tpu.memory_space<vmem>>, %arg7: memref<1x784xf32, #tpu.memory_space<vmem>>, %arg8: memref<1x784xf32, #tpu.memory_space<vmem>>) attributes {dimension_semantics = [#tpu.dimension_semantics<parallel>], iteration_bounds = array<i64: 1>, scalar_prefetch = 0 : i64, scratch_operands = 0 : i64, tpu.core_type = #tpu.core_type<tc>, window_params = [{transform_indices = @transform_0, window_bounds = array<i64: 16, 784>}, {transform_indices = @transform_1, window_bounds = array<i64: 16, 784>}, {transform_indices = @transform_2, window_bounds = array<i64: 16, 16>}, {pipeline_mode = #tpu.pipeline_mode<synchronous>, transform_indices = @transform_3, window_bounds = array<i64: 784, 256>}, {pipeline_mode = #tpu.pipeline_mode<synchronous>, transform_indices = @transform_4, window_bounds = array<i64: 16, 256>}, {pipeline_mode = #tpu.pipeline_mode<synchronous>, transform_indices = @transform_5, window_bounds = array<i64: 256, 784>}, {pipeline_mode = #tpu.pipeline_mode<synchronous>, transform_indices = @transform_6, window_bounds = array<i64: 1, 784>}, {transform_indices = @transform_7, window_bounds = array<i64: 1, 784>}]} {
    %c0 = arith.constant 0 : index
    %c0_0 = arith.constant 0 : index
    %0 = vector.load %arg1[%c0, %c0_0] : memref<16x784xbf16, #tpu.memory_space<vmem>>, vector<16x784xbf16>
    %1 = arith.extf %0 : vector<16x784xbf16> to vector<16x784xf32>
    %c0_1 = arith.constant 0 : index
    %c0_2 = arith.constant 0 : index
    %2 = vector.load %arg2[%c0_1, %c0_2] : memref<16x784xbf16, #tpu.memory_space<vmem>>, vector<16x784xbf16>
    %3 = arith.extf %2 : vector<16x784xbf16> to vector<16x784xf32>
    %c0_3 = arith.constant 0 : index
    %c0_4 = arith.constant 0 : index
    %4 = vector.load %arg3[%c0_3, %c0_4] : memref<16x16xf32, #tpu.memory_space<vmem>>, vector<16x16xf32>
    %5 = vector.extract_strided_slice %4 {offsets = [0, 12], sizes = [16, 1], strides = [1, 1]} : vector<16x16xf32> to vector<16x1xf32>
    %6 = vector.extract_strided_slice %4 {offsets = [0, 13], sizes = [16, 1], strides = [1, 1]} : vector<16x16xf32> to vector<16x1xf32>
    %7 = vector.extract_strided_slice %4 {offsets = [0, 14], sizes = [16, 1], strides = [1, 1]} : vector<16x16xf32> to vector<16x1xf32>
    %8 = vector.broadcast %5 : vector<16x1xf32> to vector<16x784xf32>
    %9 = arith.mulf %8, %1 : vector<16x784xf32>
    %10 = vector.broadcast %6 : vector<16x1xf32> to vector<16x784xf32>
    %11 = arith.mulf %10, %3 : vector<16x784xf32>
    %12 = arith.addf %9, %11 : vector<16x784xf32>
    %13 = arith.truncf %12 : vector<16x784xf32> to vector<16x784xbf16>
    %c0_5 = arith.constant 0 : index
    %c0_6 = arith.constant 0 : index
    %14 = vector.load %arg4[%c0_5, %c0_6] : memref<784x256xbf16, #tpu.memory_space<vmem>>, vector<784x256xbf16>
    %cst = arith.constant dense<0.000000e+00> : vector<16x256xf32>
    %15 = tpu.matmul %13, %14, %cst {dimension_numbers = #tpu.dot_dimension_numbers<[1], [0], [0], [1], [0, 0, 1, 1], [], []>} : vector<16x784xbf16>, vector<784x256xbf16>, vector<16x256xf32> -> vector<16x256xf32>
    %16 = arith.truncf %4 : vector<16x16xf32> to vector<16x16xbf16>
    %c0_7 = arith.constant 0 : index
    %c0_8 = arith.constant 0 : index
    %17 = vector.load %arg5[%c0_7, %c0_8] : memref<16x256xbf16, #tpu.memory_space<vmem>>, vector<16x256xbf16>
    %cst_9 = arith.constant dense<0.000000e+00> : vector<16x256xf32>
    %18 = tpu.matmul %16, %17, %cst_9 {dimension_numbers = #tpu.dot_dimension_numbers<[1], [0], [0], [1], [0, 0, 1, 1], [], []>} : vector<16x16xbf16>, vector<16x256xbf16>, vector<16x256xf32> -> vector<16x256xf32>
    %19 = arith.addf %15, %18 : vector<16x256xf32>
    %cst_10 = arith.constant 0.000000e+00 : f32
    %20 = vector.broadcast %cst_10 : f32 to vector<16x256xf32>
    %21 = arith.maximumf %19, %20 : vector<16x256xf32>
    %22 = arith.truncf %21 : vector<16x256xf32> to vector<16x256xbf16>
    %c0_11 = arith.constant 0 : index
    %c0_12 = arith.constant 0 : index
    %23 = vector.load %arg6[%c0_11, %c0_12] : memref<256x784xbf16, #tpu.memory_space<vmem>>, vector<256x784xbf16>
    %cst_13 = arith.constant dense<0.000000e+00> : vector<16x784xf32>
    %24 = tpu.matmul %22, %23, %cst_13 {dimension_numbers = #tpu.dot_dimension_numbers<[1], [0], [0], [1], [0, 0, 1, 1], [], []>} : vector<16x256xbf16>, vector<256x784xbf16>, vector<16x784xf32> -> vector<16x784xf32>
    %c0_14 = arith.constant 0 : index
    %c0_15 = arith.constant 0 : index
    %25 = vector.load %arg7[%c0_14, %c0_15] : memref<1x784xf32, #tpu.memory_space<vmem>>, vector<1x784xf32>
    %26 = vector.broadcast %25 : vector<1x784xf32> to vector<16x784xf32>
    %27 = arith.addf %24, %26 : vector<16x784xf32>
    %28 = arith.subf %3, %27 : vector<16x784xf32>
    %c0_i32 = arith.constant 0 : i32
    %29 = arith.cmpi ne, %arg0, %c0_i32 : i32
    %30 = arith.extui %29 : i1 to i32
    %c0_i32_16 = arith.constant 0 : i32
    %31 = arith.cmpi ne, %30, %c0_i32_16 : i32
    scf.if %31 {
      %35 = arith.mulf %28, %28 : vector<16x784xf32>
      %cst_19 = arith.constant dense<0.000000e+00> : vector<784xf32>
      %36 = vector.multi_reduction <add>, %35, %cst_19 [0] : vector<16x784xf32> to vector<784xf32>
      %37 = vector.shape_cast %36 : vector<784xf32> to vector<1x784xf32>
      %c0_20 = arith.constant 0 : index
      %c0_21 = arith.constant 0 : index
      %38 = vector.load %arg8[%c0_20, %c0_21] : memref<1x784xf32, #tpu.memory_space<vmem>>, vector<1x784xf32>
      tpu.vector_store %arg8[%c0_20, %c0_21], %37 {strides = array<i32>} : memref<1x784xf32, #tpu.memory_space<vmem>>, vector<1x784xf32>,
    } else {
    }
    %c0_i32_17 = arith.constant 0 : i32
    %32 = arith.cmpi eq, %arg0, %c0_i32_17 : i32
    %33 = arith.extui %32 : i1 to i32
    %c0_i32_18 = arith.constant 0 : i32
    %34 = arith.cmpi ne, %33, %c0_i32_18 : i32
    scf.if %34 {
      %35 = vector.broadcast %7 : vector<16x1xf32> to vector<16x784xf32>
      %36 = arith.mulf %28, %35 : vector<16x784xf32>
      %37 = arith.mulf %36, %36 : vector<16x784xf32>
      %cst_19 = arith.constant dense<0.000000e+00> : vector<784xf32>
      %38 = vector.multi_reduction <add>, %37, %cst_19 [0] : vector<16x784xf32> to vector<784xf32>
      %39 = vector.shape_cast %38 : vector<784xf32> to vector<1x784xf32>
      %c0_20 = arith.constant 0 : index
      %c0_21 = arith.constant 0 : index
      %40 = vector.load %arg8[%c0_20, %c0_21] : memref<1x784xf32, #tpu.memory_space<vmem>>, vector<1x784xf32>
      tpu.vector_store %arg8[%c0_20, %c0_21], %39 {strides = array<i32>} : memref<1x784xf32, #tpu.memory_space<vmem>>, vector<1x784xf32>,
    } else {
    }
    return
  }
  func.func @transform_0(%arg0: i32) -> (i32, i32) {
    %c0_i32 = arith.constant 0 : i32
    %c0_i32_0 = arith.constant 0 : i32
    return %arg0, %c0_i32 : i32, i32
  }
  func.func @transform_1(%arg0: i32) -> (i32, i32) {
    %c0_i32 = arith.constant 0 : i32
    %c0_i32_0 = arith.constant 0 : i32
    return %arg0, %c0_i32 : i32, i32
  }
  func.func @transform_2(%arg0: i32) -> (i32, i32) {
    %c0_i32 = arith.constant 0 : i32
    %c0_i32_0 = arith.constant 0 : i32
    return %arg0, %c0_i32 : i32, i32
  }
  func.func @transform_3(%arg0: i32) -> (i32, i32) {
    %c0_i32 = arith.constant 0 : i32
    %c0_i32_0 = arith.constant 0 : i32
    %c0_i32_1 = arith.constant 0 : i32
    return %c0_i32, %c0_i32_0 : i32, i32
  }
  func.func @transform_4(%arg0: i32) -> (i32, i32) {
    %c0_i32 = arith.constant 0 : i32
    %c0_i32_0 = arith.constant 0 : i32
    %c0_i32_1 = arith.constant 0 : i32
    return %c0_i32, %c0_i32_0 : i32, i32
  }
  func.func @transform_5(%arg0: i32) -> (i32, i32) {
    %c0_i32 = arith.constant 0 : i32
    %c0_i32_0 = arith.constant 0 : i32
    %c0_i32_1 = arith.constant 0 : i32
    return %c0_i32, %c0_i32_0 : i32, i32
  }
  func.func @transform_6(%arg0: i32) -> (i32, i32) {
    %c0_i32 = arith.constant 0 : i32
    %c0_i32_0 = arith.constant 0 : i32
    %c0_i32_1 = arith.constant 0 : i32
    return %c0_i32, %c0_i32_0 : i32, i32
  }
  func.func @transform_7(%arg0: i32) -> (i32, i32) {
    %c0_i32 = arith.constant 0 : i32
    %c0_i32_0 = arith.constant 0 : i32
    return %arg0, %c0_i32 : i32, i32
  }
}

</mosaic_0001>

<llo_original>
// kernel: tpu_custom_call.1
$region0: #{tpu_custom_call.1}
  #allocation0 [shape = 'u32[]', space=smem, size = 0x4, offset = 0x4, fixed_abs, tag = 'smem constant byte address 0x4 - core index']
  #allocation1 [shape = 'u32[144,128]{1,0:T(1,128)}', space=vmem, size = 0x12000, scoped, tag = 'internal scratch']
  %s0 = inlined_call_operand.vmem [shape: bf16[16,784], index: 0, kind: input, shape index: {}]
  %s1 = inlined_call_operand.vmem [shape: bf16[16,784], index: 1, kind: input, shape index: {}]
  %s2 = inlined_call_operand.vmem [shape: f32[16,16], index: 2, kind: input, shape index: {}]
  %s3 = inlined_call_operand.vmem [shape: bf16[784,256], index: 3, kind: input, shape index: {}]
  %s4 = inlined_call_operand.vmem [shape: bf16[16,256], index: 4, kind: input, shape index: {}]
  %s5 = inlined_call_operand.vmem [shape: bf16[256,784], index: 5, kind: input, shape index: {}]
  %s6 = inlined_call_operand.vmem [shape: f32[1,784], index: 6, kind: input, shape index: {}]
  %s7 = inlined_call_operand.hbm [shape: f32[1,784], index: 7, kind: output, shape index: {}]
  %s8 = sld [smem:[#allocation0]]
  $region46: #{tpu_custom_call.1} parent=0
    _
  %s10 = ssub.s32 1, %s8
  %s11 = scalar_select 0, %s10, %s8
  $region1: #{tpu_custom_call.1} parent=0
    #allocation2 [shape = 'u8[3584]{0}', space=vmem, size = 0x1000, scoped, tag = 'output window, operand 0, single buffered']
    #allocation3 [shape = 's32[1]{0}', space=sflag, size = 0x4, scoped, tag = 'scoped memory for tpu_custom_call.1']
    %12 = vsyncpa [#allocation3], 0
    // Predicated region
    $region2: #{tpu_custom_call.1} parent=1 // pred_check
      _
    $region3: #{tpu_custom_call.1} parent=1 // pred_check_branch
      %14 = sbr.rel (0) target = $region5
    $region4: #{tpu_custom_call.1} parent=1 // pred_region
      _
    $region5: #{tpu_custom_call.1} parent=1 // pred_fallthru
      _
    // Predicated region
    $region6: #{tpu_custom_call.1} parent=1 // pred_check
      _
    $region7: #{tpu_custom_call.1} parent=1 // pred_check_branch
      %16 = sbr.rel (0) target = $region9
    $region8: #{tpu_custom_call.1} parent=1 // pred_region
      _
    $region9: #{tpu_custom_call.1} parent=1 // pred_fallthru
      _
    // Predicated region
    $region10: #{tpu_custom_call.1} parent=1 // pred_check
      _
    $region11: #{tpu_custom_call.1} parent=1 // pred_check_branch
      %18 = sbr.rel (0) target = $region13
    $region12: #{tpu_custom_call.1} parent=1 // pred_region
      _
    $region13: #{tpu_custom_call.1} parent=1 // pred_fallthru
      _
    // Predicated region
    $region14: #{tpu_custom_call.1} parent=1 // pred_check
      _
    $region15: #{tpu_custom_call.1} parent=1 // pred_check_branch
      %20 = sbr.rel (0) target = $region17
    $region16: #{tpu_custom_call.1} parent=1 // pred_region
      _
    $region17: #{tpu_custom_call.1} parent=1 // pred_fallthru
      _
    // Predicated region
    $region18: #{tpu_custom_call.1} parent=1 // pred_check
      _
    $region19: #{tpu_custom_call.1} parent=1 // pred_check_branch
      %22 = sbr.rel (0) target = $region21
    $region20: #{tpu_custom_call.1} parent=1 // pred_region
      _
    $region21: #{tpu_custom_call.1} parent=1 // pred_fallthru
      _
    // Predicated region
    $region22: #{tpu_custom_call.1} parent=1 // pred_check
      _
    $region23: #{tpu_custom_call.1} parent=1 // pred_check_branch
      %24 = sbr.rel (0) target = $region25
    $region24: #{tpu_custom_call.1} parent=1 // pred_region
      _
    $region25: #{tpu_custom_call.1} parent=1 // pred_fallthru
      _
    // Predicated region
    $region26: #{tpu_custom_call.1} parent=1 // pred_check
      _
    $region27: #{tpu_custom_call.1} parent=1 // pred_check_branch
      %26 = sbr.rel (0) target = $region29
    $region28: #{tpu_custom_call.1} parent=1 // pred_region
      _
    $region29: #{tpu_custom_call.1} parent=1 // pred_fallthru
      _
    %v28 = vld [vmem:[%s0] sm:$0xff]
    %v29 = vld [vmem:[%s0 + $0x8] sm:$0xff]
    %v30 = vld [vmem:[%s0 + $0x10] sm:$0xff]
    %v31 = vld [vmem:[%s0 + $0x18] sm:$0xf]
    %v32 = vld [vmem:[%s0 + $0x1c] sm:$0xff]
    %v33 = vld [vmem:[%s0 + $0x24] sm:$0xff]
    %v34 = vld [vmem:[%s0 + $0x2c] sm:$0xff]
    %v35 = vld [vmem:[%s0 + $0x34] sm:$0xf]
    %v36 = vunpack.c.l.bf16 %v28
    %v37 = vunpack.c.h.bf16 %v28
    %v38 = vunpack.c.l.bf16 %v29
    %v39 = vunpack.c.h.bf16 %v29
    %v40 = vunpack.c.l.bf16 %v30
    %v41 = vunpack.c.h.bf16 %v30
    %v42 = vunpack.c.l.bf16 %v31
    %v43 = vunpack.c.l.bf16 %v32
    %v44 = vunpack.c.h.bf16 %v32
    %v45 = vunpack.c.l.bf16 %v33
    %v46 = vunpack.c.h.bf16 %v33
    %v47 = vunpack.c.l.bf16 %v34
    %v48 = vunpack.c.h.bf16 %v34
    %v49 = vunpack.c.l.bf16 %v35
    %v50 = vld [vmem:[%s1] sm:$0xff]
    %v51 = vld [vmem:[%s1 + $0x8] sm:$0xff]
    %v52 = vld [vmem:[%s1 + $0x10] sm:$0xff]
    %v53 = vld [vmem:[%s1 + $0x18] sm:$0xf]
    %v54 = vld [vmem:[%s1 + $0x1c] sm:$0xff]
    %v55 = vld [vmem:[%s1 + $0x24] sm:$0xff]
    %v56 = vld [vmem:[%s1 + $0x2c] sm:$0xff]
    %v57 = vld [vmem:[%s1 + $0x34] sm:$0xf]
    %v58 = vunpack.c.l.bf16 %v50
    %v59 = vunpack.c.h.bf16 %v50
    %v60 = vunpack.c.l.bf16 %v51
    %v61 = vunpack.c.h.bf16 %v51
    %v62 = vunpack.c.l.bf16 %v52
    %v63 = vunpack.c.h.bf16 %v52
    %v64 = vunpack.c.l.bf16 %v53
    %v65 = vunpack.c.l.bf16 %v54
    %v66 = vunpack.c.h.bf16 %v54
    %v67 = vunpack.c.l.bf16 %v55
    %v68 = vunpack.c.h.bf16 %v55
    %v69 = vunpack.c.l.bf16 %v56
    %v70 = vunpack.c.h.bf16 %v56
    %v71 = vunpack.c.l.bf16 %v57
    %v72 = vld [vmem:[%s2] sm:$0xff]
    %v73 = vld [vmem:[%s2 + $0x8] sm:$0xff]
    %75 = vset.pattern.permute.xlu0 12
    %76 = vperm.xlu0 %75, %v72
    %v77 = vpop.permute.xlu0 %76
    %80 = vset.pattern.permute.xlu0 12
    %81 = vperm.xlu0 %80, %v73
    %v82 = vpop.permute.xlu0 %81
    %v84 = vmul.f32 %v77, %v36
    %v85 = vmul.f32 %v77, %v37
    %v86 = vmul.f32 %v77, %v38
    %v87 = vmul.f32 %v77, %v39
    %v88 = vmul.f32 %v77, %v40
    %v89 = vmul.f32 %v77, %v41
    %v90 = vmul.f32 %v77, %v42
    %v91 = vmul.f32 %v82, %v43
    %v92 = vmul.f32 %v82, %v44
    %v93 = vmul.f32 %v82, %v45
    %v94 = vmul.f32 %v82, %v46
    %v95 = vmul.f32 %v82, %v47
    %v96 = vmul.f32 %v82, %v48
    %v97 = vmul.f32 %v82, %v49
    %98 = vset.pattern.permute.xlu0 13
    %99 = vperm.xlu0 %98, %v72
    %v100 = vpop.permute.xlu0 %99
    %102 = vset.pattern.permute.xlu0 13
    %103 = vperm.xlu0 %102, %v73
    %v104 = vpop.permute.xlu0 %103
    %v106 = vmul.f32 %v100, %v58
    %v107 = vmul.f32 %v100, %v59
    %v108 = vmul.f32 %v100, %v60
    %v109 = vmul.f32 %v100, %v61
    %v110 = vmul.f32 %v100, %v62
    %v111 = vmul.f32 %v100, %v63
    %v112 = vmul.f32 %v100, %v64
    %v113 = vmul.f32 %v104, %v65
    %v114 = vmul.f32 %v104, %v66
    %v115 = vmul.f32 %v104, %v67
    %v116 = vmul.f32 %v104, %v68
    %v117 = vmul.f32 %v104, %v69
    %v118 = vmul.f32 %v104, %v70
    %v119 = vmul.f32 %v104, %v71
    %v120 = vadd.f32 %v84, %v106
    %v121 = vadd.f32 %v85, %v107
    %v122 = vadd.f32 %v86, %v108
    %v123 = vadd.f32 %v87, %v109
    %v124 = vadd.f32 %v88, %v110
    %v125 = vadd.f32 %v89, %v111
    %v126 = vadd.f32 %v90, %v112
    %v127 = vadd.f32 %v91, %v113
    %v128 = vadd.f32 %v92, %v114
    %v129 = vadd.f32 %v93, %v115
    %v130 = vadd.f32 %v94, %v116
    %v131 = vadd.f32 %v95, %v117
    %v132 = vadd.f32 %v96, %v118
    %v133 = vadd.f32 %v97, %v119
    %v134 = vpack.c.bf16 %v127, %v120
    %v135 = vpack.c.bf16 %v128, %v121
    %v136 = vpack.c.bf16 %v129, %v122
    %v137 = vpack.c.bf16 %v130, %v123
    %v138 = vpack.c.bf16 %v131, %v124
    %v139 = vpack.c.bf16 %v132, %v125
    %v140 = vpack.c.bf16 %v133, %v126
    %v141 = vld [vmem:[%s3] sm:$0xff]
    %v142 = vld [vmem:[%s3 + $0x8] sm:$0xff]
    %v143 = vld [vmem:[%s3 + $0x10] sm:$0xff]
    %v144 = vld [vmem:[%s3 + $0x18] sm:$0xff]
    %v145 = vld [vmem:[%s3 + $0x20] sm:$0xff]
    %v146 = vld [vmem:[%s3 + $0x28] sm:$0xff]
    %v147 = vld [vmem:[%s3 + $0x30] sm:$0xff]
    %v148 = vld [vmem:[%s3 + $0x38] sm:$0xff]
    %v149 = vld [vmem:[%s3 + $0x40] sm:$0xff]
    %v150 = vld [vmem:[%s3 + $0x48] sm:$0xff]
    %v151 = vld [vmem:[%s3 + $0x50] sm:$0xff]
    %v152 = vld [vmem:[%s3 + $0x58] sm:$0xff]
    %v153 = vld [vmem:[%s3 + $0x60] sm:$0xff]
    %v154 = vld [vmem:[%s3 + $0x68] sm:$0xff]
    %v155 = vld [vmem:[%s3 + $0x70] sm:$0xff]
    %v156 = vld [vmem:[%s3 + $0x78] sm:$0xff]
    %v157 = vld [vmem:[%s3 + $0x80] sm:$0xff]
    %v158 = vld [vmem:[%s3 + $0x88] sm:$0xff]
    %v159 = vld [vmem:[%s3 + $0x90] sm:$0xff]
    %v160 = vld [vmem:[%s3 + $0x98] sm:$0xff]
    %v161 = vld [vmem:[%s3 + $0xa0] sm:$0xff]
    %v162 = vld [vmem:[%s3 + $0xa8] sm:$0xff]
    %v163 = vld [vmem:[%s3 + $0xb0] sm:$0xff]
    %v164 = vld [vmem:[%s3 + $0xb8] sm:$0xff]
    %v165 = vld [vmem:[%s3 + $0xc0] sm:$0xff]
    %v166 = vld [vmem:[%s3 + $0xc8] sm:$0xff]
    %v167 = vld [vmem:[%s3 + $0xd0] sm:$0xff]
    %v168 = vld [vmem:[%s3 + $0xd8] sm:$0xff]
    %v169 = vld [vmem:[%s3 + $0xe0] sm:$0xff]
    %v170 = vld [vmem:[%s3 + $0xe8] sm:$0xff]
    %v171 = vld [vmem:[%s3 + $0xf0] sm:$0xff]
    %v172 = vld [vmem:[%s3 + $0xf8] sm:$0xff]
    %v173 = vld [vmem:[%s3 + $0x100] sm:$0xff]
    %v174 = vld [vmem:[%s3 + $0x108] sm:$0xff]
    %v175 = vld [vmem:[%s3 + $0x110] sm:$0xff]
    %v176 = vld [vmem:[%s3 + $0x118] sm:$0xff]
    %v177 = vld [vmem:[%s3 + $0x120] sm:$0xff]
    %v178 = vld [vmem:[%s3 + $0x128] sm:$0xff]
    %v179 = vld [vmem:[%s3 + $0x130] sm:$0xff]
    %v180 = vld [vmem:[%s3 + $0x138] sm:$0xff]
    %v181 = vld [vmem:[%s3 + $0x140] sm:$0xff]
    %v182 = vld [vmem:[%s3 + $0x148] sm:$0xff]
    %v183 = vld [vmem:[%s3 + $0x150] sm:$0xff]
    %v184 = vld [vmem:[%s3 + $0x158] sm:$0xff]
    %v185 = vld [vmem:[%s3 + $0x160] sm:$0xff]
    %v186 = vld [vmem:[%s3 + $0x168] sm:$0xff]
    %v187 = vld [vmem:[%s3 + $0x170] sm:$0xff]
    %v188 = vld [vmem:[%s3 + $0x178] sm:$0xff]
    %v189 = vld [vmem:[%s3 + $0x180] sm:$0xff]
    %v190 = vld [vmem:[%s3 + $0x188] sm:$0xff]
    %v191 = vld [vmem:[%s3 + $0x190] sm:$0xff]
    %v192 = vld [vmem:[%s3 + $0x198] sm:$0xff]
    %v193 = vld [vmem:[%s3 + $0x1a0] sm:$0xff]
    %v194 = vld [vmem:[%s3 + $0x1a8] sm:$0xff]
    %v195 = vld [vmem:[%s3 + $0x1b0] sm:$0xff]
    %v196 = vld [vmem:[%s3 + $0x1b8] sm:$0xff]
    %v197 = vld [vmem:[%s3 + $0x1c0] sm:$0xff]
    %v198 = vld [vmem:[%s3 + $0x1c8] sm:$0xff]
    %v199 = vld [vmem:[%s3 + $0x1d0] sm:$0xff]
    %v200 = vld [vmem:[%s3 + $0x1d8] sm:$0xff]
    %v201 = vld [vmem:[%s3 + $0x1e0] sm:$0xff]
    %v202 = vld [vmem:[%s3 + $0x1e8] sm:$0xff]
    %v203 = vld [vmem:[%s3 + $0x1f0] sm:$0xff]
    %v204 = vld [vmem:[%s3 + $0x1f8] sm:$0xff]
    %v205 = vld [vmem:[%s3 + $0x200] sm:$0xff]
    %v206 = vld [vmem:[%s3 + $0x208] sm:$0xff]
    %v207 = vld [vmem:[%s3 + $0x210] sm:$0xff]
    %v208 = vld [vmem:[%s3 + $0x218] sm:$0xff]
    %v209 = vld [vmem:[%s3 + $0x220] sm:$0xff]
    %v210 = vld [vmem:[%s3 + $0x228] sm:$0xff]
    %v211 = vld [vmem:[%s3 + $0x230] sm:$0xff]
    %v212 = vld [vmem:[%s3 + $0x238] sm:$0xff]
    %v213 = vld [vmem:[%s3 + $0x240] sm:$0xff]
    %v214 = vld [vmem:[%s3 + $0x248] sm:$0xff]
    %v215 = vld [vmem:[%s3 + $0x250] sm:$0xff]
    %v216 = vld [vmem:[%s3 + $0x258] sm:$0xff]
    %v217 = vld [vmem:[%s3 + $0x260] sm:$0xff]
    %v218 = vld [vmem:[%s3 + $0x268] sm:$0xff]
    %v219 = vld [vmem:[%s3 + $0x270] sm:$0xff]
    %v220 = vld [vmem:[%s3 + $0x278] sm:$0xff]
    %v221 = vld [vmem:[%s3 + $0x280] sm:$0xff]
    %v222 = vld [vmem:[%s3 + $0x288] sm:$0xff]
    %v223 = vld [vmem:[%s3 + $0x290] sm:$0xff]
    %v224 = vld [vmem:[%s3 + $0x298] sm:$0xff]
    %v225 = vld [vmem:[%s3 + $0x2a0] sm:$0xff]
    %v226 = vld [vmem:[%s3 + $0x2a8] sm:$0xff]
    %v227 = vld [vmem:[%s3 + $0x2b0] sm:$0xff]
    %v228 = vld [vmem:[%s3 + $0x2b8] sm:$0xff]
    %v229 = vld [vmem:[%s3 + $0x2c0] sm:$0xff]
    %v230 = vld [vmem:[%s3 + $0x2c8] sm:$0xff]
    %v231 = vld [vmem:[%s3 + $0x2d0] sm:$0xff]
    %v232 = vld [vmem:[%s3 + $0x2d8] sm:$0xff]
    %v233 = vld [vmem:[%s3 + $0x2e0] sm:$0xff]
    %v234 = vld [vmem:[%s3 + $0x2e8] sm:$0xff]
    %v235 = vld [vmem:[%s3 + $0x2f0] sm:$0xff]
    %v236 = vld [vmem:[%s3 + $0x2f8] sm:$0xff]
    %v237 = vld [vmem:[%s3 + $0x300] sm:$0xff]
    %v238 = vld [vmem:[%s3 + $0x308] sm:$0xff]
    %v239 = vpack.c.bf16 %v73, %v72
    %v240 = vld [vmem:[%s4] sm:$0xff]
    %v241 = vld [vmem:[%s4 + $0x8] sm:$0xff]
    %v244 = vunpack.c.l.b16 %v240
    %v245 = vunpack.c.h.b16 %v240
    %v246 = vunpack.c.l.b16 %v241
    %v247 = vunpack.c.h.b16 %v241
    %v248 = vpack.c.b16 %v246, %v244
    %v249 = vpack.c.b16 %v247, %v245
    %vm252 = vcmask 130048
    %v254 = vsel %vm252, %v239, 0
    %256 = vmatprep.subr.bf16.mxu0 %v249
    %257 = vmatpush1.bf16.msra.mxu0 %v248
    %258 = vmatprep.subr.bf16.mxu0 0
    %259 = vmatpush1.bf16.msra.mxu0 0
    %260 = vmatprep.subr.bf16.mxu0 0
    %261 = vmatpush1.bf16.msra.mxu0 0
    %262 = vmatprep.subr.bf16.mxu0 0
    %263 = vmatpush1.bf16.msra.mxu0 0
    %264 = vmatprep.subr.bf16.mxu0 0
    %265 = vmatpush1.bf16.msra.mxu0 0
    %266 = vmatprep.subr.bf16.mxu0 0
    %267 = vmatpush1.bf16.msra.mxu0 0
    %268 = vmatprep.subr.bf16.mxu0 0
    %269 = vmatpush1.bf16.msra.mxu0 0
    %270 = vmatprep.subr.bf16.mxu0 0
    %271 = vmatpush1.bf16.msra.mxu0 0
    %272 = vmatprep.subr.bf16.mxu0 0
    %273 = vmatpush1.bf16.msra.mxu0 0
    %274 = vmatprep.subr.bf16.mxu0 0
    %275 = vmatpush1.bf16.msra.mxu0 0
    %276 = vmatprep.subr.bf16.mxu0 0
    %277 = vmatpush1.bf16.msra.mxu0 0
    %278 = vmatprep.subr.bf16.mxu0 0
    %279 = vmatpush1.bf16.msra.mxu0 0
    %280 = vmatprep.subr.bf16.mxu0 0
    %281 = vmatpush1.bf16.msra.mxu0 0
    %282 = vmatprep.subr.bf16.mxu0 0
    %283 = vmatpush1.bf16.msra.mxu0 0
    %284 = vmatprep.subr.bf16.mxu0 0
    %285 = vmatpush1.bf16.msra.mxu0 0
    %286 = vmatprep.subr.bf16.mxu0 0
    %287 = vmatpush1.bf16.msra.mxu0 0
    %288 = vmatprep.mubr.bf16.mxu0 0
    %289 = vmatmul.mubr.bf16.gmra.mrb[0].mxu0 %v254
    %v290 = vpop.f32.mrb[0].mxu0
    %v291 = vadd.f32 0.0, %v290
    %v292 = vpop.f32.mrb[0].mxu0
    %v293 = vadd.f32 0.0, %v292
    %v294 = vpop.f32.mrb[0].mxu0
    %v295 = vadd.f32 0.0, %v294
    %v296 = vpop.f32.mrb[0].mxu0
    %v297 = vadd.f32 0.0, %v296
    %298 = vdwg.mxu0
    %v397 = vunpack.c.l.b16 %v141
    %v398 = vunpack.c.h.b16 %v141
    %v399 = vunpack.c.l.b16 %v142
    %v400 = vunpack.c.h.b16 %v142
    %v401 = vunpack.c.l.b16 %v143
    %v402 = vunpack.c.h.b16 %v143
    %v403 = vunpack.c.l.b16 %v144
    %v404 = vunpack.c.h.b16 %v144
    %v405 = vunpack.c.l.b16 %v145
    %v406 = vunpack.c.h.b16 %v145
    %v407 = vunpack.c.l.b16 %v146
    %v408 = vunpack.c.h.b16 %v146
    %v409 = vunpack.c.l.b16 %v147
    %v410 = vunpack.c.h.b16 %v147
    %v411 = vunpack.c.l.b16 %v148
    %v412 = vunpack.c.h.b16 %v148
    %v413 = vunpack.c.l.b16 %v149
    %v414 = vunpack.c.h.b16 %v149
    %v415 = vunpack.c.l.b16 %v150
    %v416 = vunpack.c.h.b16 %v150
    %v417 = vunpack.c.l.b16 %v151
    %v418 = vunpack.c.h.b16 %v151
    %v419 = vunpack.c.l.b16 %v152
    %v420 = vunpack.c.h.b16 %v152
    %v421 = vunpack.c.l.b16 %v153
    %v422 = vunpack.c.h.b16 %v153
    %v423 = vunpack.c.l.b16 %v154
    %v424 = vunpack.c.h.b16 %v154
    %v425 = vunpack.c.l.b16 %v155
    %v426 = vunpack.c.h.b16 %v155
    %v427 = vunpack.c.l.b16 %v156
    %v428 = vunpack.c.h.b16 %v156
    %v429 = vunpack.c.l.b16 %v157
    %v430 = vunpack.c.h.b16 %v157
    %v431 = vunpack.c.l.b16 %v158
    %v432 = vunpack.c.h.b16 %v158
    %v433 = vunpack.c.l.b16 %v159
    %v434 = vunpack.c.h.b16 %v159
    %v435 = vunpack.c.l.b16 %v160
    %v436 = vunpack.c.h.b16 %v160
    %v437 = vunpack.c.l.b16 %v161
    %v438 = vunpack.c.h.b16 %v161
    %v439 = vunpack.c.l.b16 %v162
    %v440 = vunpack.c.h.b16 %v162
    %v441 = vunpack.c.l.b16 %v163
    %v442 = vunpack.c.h.b16 %v163
    %v443 = vunpack.c.l.b16 %v164
    %v444 = vunpack.c.h.b16 %v164
    %v445 = vunpack.c.l.b16 %v165
    %v446 = vunpack.c.h.b16 %v165
    %v447 = vunpack.c.l.b16 %v166
    %v448 = vunpack.c.h.b16 %v166
    %v449 = vunpack.c.l.b16 %v167
    %v450 = vunpack.c.h.b16 %v167
    %v451 = vunpack.c.l.b16 %v168
    %v452 = vunpack.c.h.b16 %v168
    %v453 = vunpack.c.l.b16 %v169
    %v454 = vunpack.c.h.b16 %v169
    %v455 = vunpack.c.l.b16 %v170
    %v456 = vunpack.c.h.b16 %v170
    %v457 = vunpack.c.l.b16 %v171
    %v458 = vunpack.c.h.b16 %v171
    %v459 = vunpack.c.l.b16 %v172
    %v460 = vunpack.c.h.b16 %v172
    %v461 = vunpack.c.l.b16 %v173
    %v462 = vunpack.c.h.b16 %v173
    %v463 = vunpack.c.l.b16 %v174
    %v464 = vunpack.c.h.b16 %v174
    %v465 = vunpack.c.l.b16 %v175
    %v466 = vunpack.c.h.b16 %v175
    %v467 = vunpack.c.l.b16 %v176
    %v468 = vunpack.c.h.b16 %v176
    %v469 = vunpack.c.l.b16 %v177
    %v470 = vunpack.c.h.b16 %v177
    %v471 = vunpack.c.l.b16 %v178
    %v472 = vunpack.c.h.b16 %v178
    %v473 = vunpack.c.l.b16 %v179
    %v474 = vunpack.c.h.b16 %v179
    %v475 = vunpack.c.l.b16 %v180
    %v476 = vunpack.c.h.b16 %v180
    %v477 = vunpack.c.l.b16 %v181
    %v478 = vunpack.c.h.b16 %v181
    %v479 = vunpack.c.l.b16 %v182
    %v480 = vunpack.c.h.b16 %v182
    %v481 = vunpack.c.l.b16 %v183
    %v482 = vunpack.c.h.b16 %v183
    %v483 = vunpack.c.l.b16 %v184
    %v484 = vunpack.c.h.b16 %v184
    %v485 = vunpack.c.l.b16 %v185
    %v486 = vunpack.c.h.b16 %v185
    %v487 = vunpack.c.l.b16 %v186
    %v488 = vunpack.c.h.b16 %v186
    %v489 = vunpack.c.l.b16 %v187
    %v490 = vunpack.c.h.b16 %v187
    %v491 = vunpack.c.l.b16 %v188
    %v492 = vunpack.c.h.b16 %v188
    %v493 = vunpack.c.l.b16 %v189
    %v494 = vunpack.c.h.b16 %v189
    %v495 = vunpack.c.l.b16 %v190
    %v496 = vunpack.c.h.b16 %v190
    %v497 = vunpack.c.l.b16 %v191
    %v498 = vunpack.c.h.b16 %v191
    %v499 = vunpack.c.l.b16 %v192
    %v500 = vunpack.c.h.b16 %v192
    %v501 = vunpack.c.l.b16 %v193
    %v502 = vunpack.c.h.b16 %v193
    %v503 = vunpack.c.l.b16 %v194
    %v504 = vunpack.c.h.b16 %v194
    %v505 = vunpack.c.l.b16 %v195
    %v506 = vunpack.c.h.b16 %v195
    %v507 = vunpack.c.l.b16 %v196
    %v508 = vunpack.c.h.b16 %v196
    %v509 = vunpack.c.l.b16 %v197
    %v510 = vunpack.c.h.b16 %v197
    %v511 = vunpack.c.l.b16 %v198
    %v512 = vunpack.c.h.b16 %v198
    %v513 = vunpack.c.l.b16 %v199
    %v514 = vunpack.c.h.b16 %v199
    %v515 = vunpack.c.l.b16 %v200
    %v516 = vunpack.c.h.b16 %v200
    %v517 = vunpack.c.l.b16 %v201
    %v518 = vunpack.c.h.b16 %v201
    %v519 = vunpack.c.l.b16 %v202
    %v520 = vunpack.c.h.b16 %v202
    %v521 = vunpack.c.l.b16 %v203
    %v522 = vunpack.c.h.b16 %v203
    %v523 = vunpack.c.l.b16 %v204
    %v524 = vunpack.c.h.b16 %v204
    %v525 = vunpack.c.l.b16 %v205
    %v526 = vunpack.c.h.b16 %v205
    %v527 = vunpack.c.l.b16 %v206
    %v528 = vunpack.c.h.b16 %v206
    %v529 = vunpack.c.l.b16 %v207
    %v530 = vunpack.c.h.b16 %v207
    %v531 = vunpack.c.l.b16 %v208
    %v532 = vunpack.c.h.b16 %v208
    %v533 = vunpack.c.l.b16 %v209
    %v534 = vunpack.c.h.b16 %v209
    %v535 = vunpack.c.l.b16 %v210
    %v536 = vunpack.c.h.b16 %v210
    %v537 = vunpack.c.l.b16 %v211
    %v538 = vunpack.c.h.b16 %v211
    %v539 = vunpack.c.l.b16 %v212
    %v540 = vunpack.c.h.b16 %v212
    %v541 = vunpack.c.l.b16 %v213
    %v542 = vunpack.c.h.b16 %v213
    %v543 = vunpack.c.l.b16 %v214
    %v544 = vunpack.c.h.b16 %v214
    %v545 = vunpack.c.l.b16 %v215
    %v546 = vunpack.c.h.b16 %v215
    %v547 = vunpack.c.l.b16 %v216
    %v548 = vunpack.c.h.b16 %v216
    %v549 = vunpack.c.l.b16 %v217
    %v550 = vunpack.c.h.b16 %v217
    %v551 = vunpack.c.l.b16 %v218
    %v552 = vunpack.c.h.b16 %v218
    %v553 = vunpack.c.l.b16 %v219
    %v554 = vunpack.c.h.b16 %v219
    %v555 = vunpack.c.l.b16 %v220
    %v556 = vunpack.c.h.b16 %v220
    %v557 = vunpack.c.l.b16 %v221
    %v558 = vunpack.c.h.b16 %v221
    %v559 = vunpack.c.l.b16 %v222
    %v560 = vunpack.c.h.b16 %v222
    %v561 = vunpack.c.l.b16 %v223
    %v562 = vunpack.c.h.b16 %v223
    %v563 = vunpack.c.l.b16 %v224
    %v564 = vunpack.c.h.b16 %v224
    %v565 = vunpack.c.l.b16 %v225
    %v566 = vunpack.c.h.b16 %v225
    %v567 = vunpack.c.l.b16 %v226
    %v568 = vunpack.c.h.b16 %v226
    %v569 = vunpack.c.l.b16 %v227
    %v570 = vunpack.c.h.b16 %v227
    %v571 = vunpack.c.l.b16 %v228
    %v572 = vunpack.c.h.b16 %v228
    %v573 = vunpack.c.l.b16 %v229
    %v574 = vunpack.c.h.b16 %v229
    %v575 = vunpack.c.l.b16 %v230
    %v576 = vunpack.c.h.b16 %v230
    %v577 = vunpack.c.l.b16 %v231
    %v578 = vunpack.c.h.b16 %v231
    %v579 = vunpack.c.l.b16 %v232
    %v580 = vunpack.c.h.b16 %v232
    %v581 = vunpack.c.l.b16 %v233
    %v582 = vunpack.c.h.b16 %v233
    %v583 = vunpack.c.l.b16 %v234
    %v584 = vunpack.c.h.b16 %v234
    %v585 = vunpack.c.l.b16 %v235
    %v586 = vunpack.c.h.b16 %v235
    %v587 = vunpack.c.l.b16 %v236
    %v588 = vunpack.c.h.b16 %v236
    %v589 = vunpack.c.l.b16 %v237
    %v590 = vunpack.c.h.b16 %v237
    %v591 = vunpack.c.l.b16 %v238
    %v592 = vunpack.c.h.b16 %v238
    %v593 = vpack.c.b16 %v399, %v397
    %v594 = vpack.c.b16 %v400, %v398
    %v595 = vpack.c.b16 %v403, %v401
    %v596 = vpack.c.b16 %v404, %v402
    %v597 = vpack.c.b16 %v407, %v405
    %v598 = vpack.c.b16 %v408, %v406
    %v599 = vpack.c.b16 %v411, %v409
    %v600 = vpack.c.b16 %v412, %v410
    %v601 = vpack.c.b16 %v415, %v413
    %v602 = vpack.c.b16 %v416, %v414
    %v603 = vpack.c.b16 %v419, %v417
    %v604 = vpack.c.b16 %v420, %v418
    %v605 = vpack.c.b16 %v423, %v421
    %v606 = vpack.c.b16 %v424, %v422
    %v607 = vpack.c.b16 %v427, %v425
    %v608 = vpack.c.b16 %v428, %v426
    %v609 = vpack.c.b16 %v431, %v429
    %v610 = vpack.c.b16 %v432, %v430
    %v611 = vpack.c.b16 %v435, %v433
    %v612 = vpack.c.b16 %v436, %v434
    %v613 = vpack.c.b16 %v439, %v437
    %v614 = vpack.c.b16 %v440, %v438
    %v615 = vpack.c.b16 %v443, %v441
    %v616 = vpack.c.b16 %v444, %v442
    %v617 = vpack.c.b16 %v447, %v445
    %v618 = vpack.c.b16 %v448, %v446
    %v619 = vpack.c.b16 %v451, %v449
    %v620 = vpack.c.b16 %v452, %v450
    %v621 = vpack.c.b16 %v455, %v453
    %v622 = vpack.c.b16 %v456, %v454
    %v623 = vpack.c.b16 %v459, %v457
    %v624 = vpack.c.b16 %v460, %v458
    %v625 = vpack.c.b16 %v463, %v461
    %v626 = vpack.c.b16 %v464, %v462
    %v627 = vpack.c.b16 %v467, %v465
    %v628 = vpack.c.b16 %v468, %v466
    %v629 = vpack.c.b16 %v471, %v469
    %v630 = vpack.c.b16 %v472, %v470
    %v631 = vpack.c.b16 %v475, %v473
    %v632 = vpack.c.b16 %v476, %v474
    %v633 = vpack.c.b16 %v479, %v477
    %v634 = vpack.c.b16 %v480, %v478
    %v635 = vpack.c.b16 %v483, %v481
    %v636 = vpack.c.b16 %v484, %v482
    %v637 = vpack.c.b16 %v487, %v485
    %v638 = vpack.c.b16 %v488, %v486
    %v639 = vpack.c.b16 %v491, %v489
    %v640 = vpack.c.b16 %v492, %v490
    %v641 = vpack.c.b16 %v495, %v493
    %v642 = vpack.c.b16 %v496, %v494
    %v643 = vpack.c.b16 %v499, %v497
    %v644 = vpack.c.b16 %v500, %v498
    %v645 = vpack.c.b16 %v503, %v501
    %v646 = vpack.c.b16 %v504, %v502
    %v647 = vpack.c.b16 %v507, %v505
    %v648 = vpack.c.b16 %v508, %v506
    %v649 = vpack.c.b16 %v511, %v509
    %v650 = vpack.c.b16 %v512, %v510
    %v651 = vpack.c.b16 %v515, %v513
    %v652 = vpack.c.b16 %v516, %v514
    %v653 = vpack.c.b16 %v519, %v517
    %v654 = vpack.c.b16 %v520, %v518
    %v655 = vpack.c.b16 %v523, %v521
    %v656 = vpack.c.b16 %v524, %v522
    %v657 = vpack.c.b16 %v527, %v525
    %v658 = vpack.c.b16 %v528, %v526
    %v659 = vpack.c.b16 %v531, %v529
    %v660 = vpack.c.b16 %v532, %v530
    %v661 = vpack.c.b16 %v535, %v533
    %v662 = vpack.c.b16 %v536, %v534
    %v663 = vpack.c.b16 %v539, %v537
    %v664 = vpack.c.b16 %v540, %v538
    %v665 = vpack.c.b16 %v543, %v541
    %v666 = vpack.c.b16 %v544, %v542
    %v667 = vpack.c.b16 %v547, %v545
    %v668 = vpack.c.b16 %v548, %v546
    %v669 = vpack.c.b16 %v551, %v549
    %v670 = vpack.c.b16 %v552, %v550
    %v671 = vpack.c.b16 %v555, %v553
    %v672 = vpack.c.b16 %v556, %v554
    %v673 = vpack.c.b16 %v559, %v557
    %v674 = vpack.c.b16 %v560, %v558
    %v675 = vpack.c.b16 %v563, %v561
    %v676 = vpack.c.b16 %v564, %v562
    %v677 = vpack.c.b16 %v567, %v565
    %v678 = vpack.c.b16 %v568, %v566
    %v679 = vpack.c.b16 %v571, %v569
    %v680 = vpack.c.b16 %v572, %v570
    %v681 = vpack.c.b16 %v575, %v573
    %v682 = vpack.c.b16 %v576, %v574
    %v683 = vpack.c.b16 %v579, %v577
    %v684 = vpack.c.b16 %v580, %v578
    %v685 = vpack.c.b16 %v583, %v581
    %v686 = vpack.c.b16 %v584, %v582
    %v687 = vpack.c.b16 %v587, %v585
    %v688 = vpack.c.b16 %v588, %v586
    %v689 = vpack.c.b16 %v591, %v589
    %v690 = vpack.c.b16 %v592, %v590
    %v790 = vsel %vm252, %v140, 0
    %792 = vmatprep.subr.bf16.mxu0 %v594
    %793 = vmatpush1.bf16.msra.mxu0 %v593
    %794 = vmatprep.subr.bf16.mxu0 %v596
    %795 = vmatpush1.bf16.msra.mxu0 %v595
    %796 = vmatprep.subr.bf16.mxu0 %v598
    %797 = vmatpush1.bf16.msra.mxu0 %v597
    %798 = vmatprep.subr.bf16.mxu0 %v600
    %799 = vmatpush1.bf16.msra.mxu0 %v599
    %800 = vmatprep.subr.bf16.mxu0 %v602
    %801 = vmatpush1.bf16.msra.mxu0 %v601
    %802 = vmatprep.subr.bf16.mxu0 %v604
    %803 = vmatpush1.bf16.msra.mxu0 %v603
    %804 = vmatprep.subr.bf16.mxu0 %v606
    %805 = vmatpush1.bf16.msra.mxu0 %v605
    %806 = vmatprep.subr.bf16.mxu0 %v608
    %807 = vmatpush1.bf16.msra.mxu0 %v607
    %808 = vmatprep.subr.bf16.mxu0 %v610
    %809 = vmatpush1.bf16.msra.mxu0 %v609
    %810 = vmatprep.subr.bf16.mxu0 %v612
    %811 = vmatpush1.bf16.msra.mxu0 %v611
    %812 = vmatprep.subr.bf16.mxu0 %v614
    %813 = vmatpush1.bf16.msra.mxu0 %v613
    %814 = vmatprep.subr.bf16.mxu0 %v616
    %815 = vmatpush1.bf16.msra.mxu0 %v615
    %816 = vmatprep.subr.bf16.mxu0 %v618
    %817 = vmatpush1.bf16.msra.mxu0 %v617
    %818 = vmatprep.subr.bf16.mxu0 %v620
    %819 = vmatpush1.bf16.msra.mxu0 %v619
    %820 = vmatprep.subr.bf16.mxu0 %v622
    %821 = vmatpush1.bf16.msra.mxu0 %v621
    %822 = vmatprep.subr.bf16.mxu0 %v624
    %823 = vmatpush1.bf16.msra.mxu0 %v623
    %824 = vmatprep.mubr.bf16.mxu0 %v135
    %825 = vmatmul.mubr.bf16.gmra.mrb[0].mxu0 %v134
    %v826 = vpop.f32.mrb[0].mxu0
    %v827 = vadd.f32 %v291, %v826
    %v828 = vpop.f32.mrb[0].mxu0
    %v829 = vadd.f32 %v293, %v828
    %v830 = vpop.f32.mrb[0].mxu0
    %v831 = vadd.f32 %v295, %v830
    %v832 = vpop.f32.mrb[0].mxu0
    %v833 = vadd.f32 %v297, %v832
    %834 = vdwg.mxu0
    %835 = vmatprep.subr.bf16.mxu0 %v626
    %836 = vmatpush1.bf16.msra.mxu0 %v625
    %837 = vmatprep.subr.bf16.mxu0 %v628
    %838 = vmatpush1.bf16.msra.mxu0 %v627
    %839 = vmatprep.subr.bf16.mxu0 %v630
    %840 = vmatpush1.bf16.msra.mxu0 %v629
    %841 = vmatprep.subr.bf16.mxu0 %v632
    %842 = vmatpush1.bf16.msra.mxu0 %v631
    %843 = vmatprep.subr.bf16.mxu0 %v634
    %844 = vmatpush1.bf16.msra.mxu0 %v633
    %845 = vmatprep.subr.bf16.mxu0 %v636
    %846 = vmatpush1.bf16.msra.mxu0 %v635
    %847 = vmatprep.subr.bf16.mxu0 %v638
    %848 = vmatpush1.bf16.msra.mxu0 %v637
    %849 = vmatprep.subr.bf16.mxu0 %v640
    %850 = vmatpush1.bf16.msra.mxu0 %v639
    %851 = vmatprep.subr.bf16.mxu0 %v642
    %852 = vmatpush1.bf16.msra.mxu0 %v641
    %853 = vmatprep.subr.bf16.mxu0 %v644
    %854 = vmatpush1.bf16.msra.mxu0 %v643
    %855 = vmatprep.subr.bf16.mxu0 %v646
    %856 = vmatpush1.bf16.msra.mxu0 %v645
    %857 = vmatprep.subr.bf16.mxu0 %v648
    %858 = vmatpush1.bf16.msra.mxu0 %v647
    %859 = vmatprep.subr.bf16.mxu0 %v650
    %860 = vmatpush1.bf16.msra.mxu0 %v649
    %861 = vmatprep.subr.bf16.mxu0 %v652
    %862 = vmatpush1.bf16.msra.mxu0 %v651
    %863 = vmatprep.subr.bf16.mxu0 %v654
    %864 = vmatpush1.bf16.msra.mxu0 %v653
    %865 = vmatprep.subr.bf16.mxu0 %v656
    %866 = vmatpush1.bf16.msra.mxu0 %v655
    %867 = vmatprep.mubr.bf16.mxu0 %v137
    %868 = vmatmul.mubr.bf16.gmra.mrb[0].mxu0 %v136
    %v869 = vpop.f32.mrb[0].mxu0
    %v870 = vadd.f32 %v827, %v869
    %v871 = vpop.f32.mrb[0].mxu0
    %v872 = vadd.f32 %v829, %v871
    %v873 = vpop.f32.mrb[0].mxu0
    %v874 = vadd.f32 %v831, %v873
    %v875 = vpop.f32.mrb[0].mxu0
    %v876 = vadd.f32 %v833, %v875
    %877 = vdwg.mxu0
    %878 = vmatprep.subr.bf16.mxu0 %v658
    %879 = vmatpush1.bf16.msra.mxu0 %v657
    %880 = vmatprep.subr.bf16.mxu0 %v660
    %881 = vmatpush1.bf16.msra.mxu0 %v659
    %882 = vmatprep.subr.bf16.mxu0 %v662
    %883 = vmatpush1.bf16.msra.mxu0 %v661
    %884 = vmatprep.subr.bf16.mxu0 %v664
    %885 = vmatpush1.bf16.msra.mxu0 %v663
    %886 = vmatprep.subr.bf16.mxu0 %v666
    %887 = vmatpush1.bf16.msra.mxu0 %v665
    %888 = vmatprep.subr.bf16.mxu0 %v668
    %889 = vmatpush1.bf16.msra.mxu0 %v667
    %890 = vmatprep.subr.bf16.mxu0 %v670
    %891 = vmatpush1.bf16.msra.mxu0 %v669
    %892 = vmatprep.subr.bf16.mxu0 %v672
    %893 = vmatpush1.bf16.msra.mxu0 %v671
    %894 = vmatprep.subr.bf16.mxu0 %v674
    %895 = vmatpush1.bf16.msra.mxu0 %v673
    %896 = vmatprep.subr.bf16.mxu0 %v676
    %897 = vmatpush1.bf16.msra.mxu0 %v675
    %898 = vmatprep.subr.bf16.mxu0 %v678
    %899 = vmatpush1.bf16.msra.mxu0 %v677
    %900 = vmatprep.subr.bf16.mxu0 %v680
    %901 = vmatpush1.bf16.msra.mxu0 %v679
    %902 = vmatprep.subr.bf16.mxu0 %v682
    %903 = vmatpush1.bf16.msra.mxu0 %v681
    %904 = vmatprep.subr.bf16.mxu0 %v684
    %905 = vmatpush1.bf16.msra.mxu0 %v683
    %906 = vmatprep.subr.bf16.mxu0 %v686
    %907 = vmatpush1.bf16.msra.mxu0 %v685
    %908 = vmatprep.subr.bf16.mxu0 %v688
    %909 = vmatpush1.bf16.msra.mxu0 %v687
    %910 = vmatprep.mubr.bf16.mxu0 %v139
    %911 = vmatmul.mubr.bf16.gmra.mrb[0].mxu0 %v138
    %v912 = vpop.f32.mrb[0].mxu0
    %v913 = vadd.f32 %v870, %v912
    %v914 = vpop.f32.mrb[0].mxu0
    %v915 = vadd.f32 %v872, %v914
    %v916 = vpop.f32.mrb[0].mxu0
    %v917 = vadd.f32 %v874, %v916
    %v918 = vpop.f32.mrb[0].mxu0
    %v919 = vadd.f32 %v876, %v918
    %920 = vdwg.mxu0
    %921 = vmatprep.subr.bf16.mxu0 %v690
    %922 = vmatpush1.bf16.msra.mxu0 %v689
    %923 = vmatprep.subr.bf16.mxu0 0
    %924 = vmatpush1.bf16.msra.mxu0 0
    %925 = vmatprep.subr.bf16.mxu0 0
    %926 = vmatpush1.bf16.msra.mxu0 0
    %927 = vmatprep.subr.bf16.mxu0 0
    %928 = vmatpush1.bf16.msra.mxu0 0
    %929 = vmatprep.subr.bf16.mxu0 0
    %930 = vmatpush1.bf16.msra.mxu0 0
    %931 = vmatprep.subr.bf16.mxu0 0
    %932 = vmatpush1.bf16.msra.mxu0 0
    %933 = vmatprep.subr.bf16.mxu0 0
    %934 = vmatpush1.bf16.msra.mxu0 0
    %935 = vmatprep.subr.bf16.mxu0 0
    %936 = vmatpush1.bf16.msra.mxu0 0
    %937 = vmatprep.subr.bf16.mxu0 0
    %938 = vmatpush1.bf16.msra.mxu0 0
    %939 = vmatprep.subr.bf16.mxu0 0
    %940 = vmatpush1.bf16.msra.mxu0 0
    %941 = vmatprep.subr.bf16.mxu0 0
    %942 = vmatpush1.bf16.msra.mxu0 0
    %943 = vmatprep.subr.bf16.mxu0 0
    %944 = vmatpush1.bf16.msra.mxu0 0
    %945 = vmatprep.subr.bf16.mxu0 0
    %946 = vmatpush1.bf16.msra.mxu0 0
    %947 = vmatprep.subr.bf16.mxu0 0
    %948 = vmatpush1.bf16.msra.mxu0 0
    %949 = vmatprep.subr.bf16.mxu0 0
    %950 = vmatpush1.bf16.msra.mxu0 0
    %951 = vmatprep.subr.bf16.mxu0 0
    %952 = vmatpush1.bf16.msra.mxu0 0
    %953 = vmatprep.mubr.bf16.mxu0 0
    %954 = vmatmul.mubr.bf16.gmra.mrb[0].mxu0 %v790
    %v955 = vpop.f32.mrb[0].mxu0
    %v956 = vadd.f32 %v913, %v955
    %v957 = vpop.f32.mrb[0].mxu0
    %v958 = vadd.f32 %v915, %v957
    %v959 = vpop.f32.mrb[0].mxu0
    %v960 = vadd.f32 %v917, %v959
    %v961 = vpop.f32.mrb[0].mxu0
    %v962 = vadd.f32 %v919, %v961
    %963 = vdwg.mxu0
    %v964 = vmax.f32 %v956, 0.0
    %v965 = vmax.f32 %v958, 0.0
    %v966 = vmax.f32 %v960, 0.0
    %v967 = vmax.f32 %v962, 0.0
    %v968 = vpack.c.bf16 %v966, %v964
    %v969 = vpack.c.bf16 %v967, %v965
    %v970 = vld [vmem:[%s5] sm:$0xff]
    %v971 = vld [vmem:[%s5 + $0x8] sm:$0xff]
    %v972 = vld [vmem:[%s5 + $0x10] sm:$0xff]
    %v973 = vld [vmem:[%s5 + $0x18] sm:$0xf]
    %v974 = vld [vmem:[%s5 + $0x1c] sm:$0xff]
    %v975 = vld [vmem:[%s5 + $0x24] sm:$0xff]
    %v976 = vld [vmem:[%s5 + $0x2c] sm:$0xff]
    %v977 = vld [vmem:[%s5 + $0x34] sm:$0xf]
    %v978 = vld [vmem:[%s5 + $0x38] sm:$0xff]
    %v979 = vld [vmem:[%s5 + $0x40] sm:$0xff]
    %v980 = vld [vmem:[%s5 + $0x48] sm:$0xff]
    %v981 = vld [vmem:[%s5 + $0x50] sm:$0xf]
    %v982 = vld [vmem:[%s5 + $0x54] sm:$0xff]
    %v983 = vld [vmem:[%s5 + $0x5c] sm:$0xff]
    %v984 = vld [vmem:[%s5 + $0x64] sm:$0xff]
    %v985 = vld [vmem:[%s5 + $0x6c] sm:$0xf]
    %v986 = vld [vmem:[%s5 + $0x70] sm:$0xff]
    %v987 = vld [vmem:[%s5 + $0x78] sm:$0xff]
    %v988 = vld [vmem:[%s5 + $0x80] sm:$0xff]
    %v989 = vld [vmem:[%s5 + $0x88] sm:$0xf]
    %v990 = vld [vmem:[%s5 + $0x8c] sm:$0xff]
    %v991 = vld [vmem:[%s5 + $0x94] sm:$0xff]
    %v992 = vld [vmem:[%s5 + $0x9c] sm:$0xff]
    %v993 = vld [vmem:[%s5 + $0xa4] sm:$0xf]
    %v994 = vld [vmem:[%s5 + $0xa8] sm:$0xff]
    %v995 = vld [vmem:[%s5 + $0xb0] sm:$0xff]
    %v996 = vld [vmem:[%s5 + $0xb8] sm:$0xff]
    %v997 = vld [vmem:[%s5 + $0xc0] sm:$0xf]
    %v998 = vld [vmem:[%s5 + $0xc4] sm:$0xff]
    %v999 = vld [vmem:[%s5 + $0xcc] sm:$0xff]
    %v1000 = vld [vmem:[%s5 + $0xd4] sm:$0xff]
    %v1001 = vld [vmem:[%s5 + $0xdc] sm:$0xf]
    %v1002 = vld [vmem:[%s5 + $0xe0] sm:$0xff]
    %v1003 = vld [vmem:[%s5 + $0xe8] sm:$0xff]
    %v1004 = vld [vmem:[%s5 + $0xf0] sm:$0xff]
    %v1005 = vld [vmem:[%s5 + $0xf8] sm:$0xf]
    %v1006 = vld [vmem:[%s5 + $0xfc] sm:$0xff]
    %v1007 = vld [vmem:[%s5 + $0x104] sm:$0xff]
    %v1008 = vld [vmem:[%s5 + $0x10c] sm:$0xff]
    %v1009 = vld [vmem:[%s5 + $0x114] sm:$0xf]
    %v1010 = vld [vmem:[%s5 + $0x118] sm:$0xff]
    %v1011 = vld [vmem:[%s5 + $0x120] sm:$0xff]
    %v1012 = vld [vmem:[%s5 + $0x128] sm:$0xff]
    %v1013 = vld [vmem:[%s5 + $0x130] sm:$0xf]
    %v1014 = vld [vmem:[%s5 + $0x134] sm:$0xff]
    %v1015 = vld [vmem:[%s5 + $0x13c] sm:$0xff]
    %v1016 = vld [vmem:[%s5 + $0x144] sm:$0xff]
    %v1017 = vld [vmem:[%s5 + $0x14c] sm:$0xf]
    %v1018 = vld [vmem:[%s5 + $0x150] sm:$0xff]
    %v1019 = vld [vmem:[%s5 + $0x158] sm:$0xff]
    %v1020 = vld [vmem:[%s5 + $0x160] sm:$0xff]
    %v1021 = vld [vmem:[%s5 + $0x168] sm:$0xf]
    %v1022 = vld [vmem:[%s5 + $0x16c] sm:$0xff]
    %v1023 = vld [vmem:[%s5 + $0x174] sm:$0xff]
    %v1024 = vld [vmem:[%s5 + $0x17c] sm:$0xff]
    %v1025 = vld [vmem:[%s5 + $0x184] sm:$0xf]
    %v1026 = vld [vmem:[%s5 + $0x188] sm:$0xff]
    %v1027 = vld [vmem:[%s5 + $0x190] sm:$0xff]
    %v1028 = vld [vmem:[%s5 + $0x198] sm:$0xff]
    %v1029 = vld [vmem:[%s5 + $0x1a0] sm:$0xf]
    %v1030 = vld [vmem:[%s5 + $0x1a4] sm:$0xff]
    %v1031 = vld [vmem:[%s5 + $0x1ac] sm:$0xff]
    %v1032 = vld [vmem:[%s5 + $0x1b4] sm:$0xff]
    %v1033 = vld [vmem:[%s5 + $0x1bc] sm:$0xf]
    %v1034 = vld [vmem:[%s5 + $0x1c0] sm:$0xff]
    %v1035 = vld [vmem:[%s5 + $0x1c8] sm:$0xff]
    %v1036 = vld [vmem:[%s5 + $0x1d0] sm:$0xff]
    %v1037 = vld [vmem:[%s5 + $0x1d8] sm:$0xf]
    %v1038 = vld [vmem:[%s5 + $0x1dc] sm:$0xff]
    %v1039 = vld [vmem:[%s5 + $0x1e4] sm:$0xff]
    %v1040 = vld [vmem:[%s5 + $0x1ec] sm:$0xff]
    %v1041 = vld [vmem:[%s5 + $0x1f4] sm:$0xf]
    %v1042 = vld [vmem:[%s5 + $0x1f8] sm:$0xff]
    %v1043 = vld [vmem:[%s5 + $0x200] sm:$0xff]
    %v1044 = vld [vmem:[%s5 + $0x208] sm:$0xff]
    %v1045 = vld [vmem:[%s5 + $0x210] sm:$0xf]
    %v1046 = vld [vmem:[%s5 + $0x214] sm:$0xff]
    %v1047 = vld [vmem:[%s5 + $0x21c] sm:$0xff]
    %v1048 = vld [vmem:[%s5 + $0x224] sm:$0xff]
    %v1049 = vld [vmem:[%s5 + $0x22c] sm:$0xf]
    %v1050 = vld [vmem:[%s5 + $0x230] sm:$0xff]
    %v1051 = vld [vmem:[%s5 + $0x238] sm:$0xff]
    %v1052 = vld [vmem:[%s5 + $0x240] sm:$0xff]
    %v1053 = vld [vmem:[%s5 + $0x248] sm:$0xf]
    %v1054 = vld [vmem:[%s5 + $0x24c] sm:$0xff]
    %v1055 = vld [vmem:[%s5 + $0x254] sm:$0xff]
    %v1056 = vld [vmem:[%s5 + $0x25c] sm:$0xff]
    %v1057 = vld [vmem:[%s5 + $0x264] sm:$0xf]
    %v1058 = vld [vmem:[%s5 + $0x268] sm:$0xff]
    %v1059 = vld [vmem:[%s5 + $0x270] sm:$0xff]
    %v1060 = vld [vmem:[%s5 + $0x278] sm:$0xff]
    %v1061 = vld [vmem:[%s5 + $0x280] sm:$0xf]
    %v1062 = vld [vmem:[%s5 + $0x284] sm:$0xff]
    %v1063 = vld [vmem:[%s5 + $0x28c] sm:$0xff]
    %v1064 = vld [vmem:[%s5 + $0x294] sm:$0xff]
    %v1065 = vld [vmem:[%s5 + $0x29c] sm:$0xf]
    %v1066 = vld [vmem:[%s5 + $0x2a0] sm:$0xff]
    %v1067 = vld [vmem:[%s5 + $0x2a8] sm:$0xff]
    %v1068 = vld [vmem:[%s5 + $0x2b0] sm:$0xff]
    %v1069 = vld [vmem:[%s5 + $0x2b8] sm:$0xf]
    %v1070 = vld [vmem:[%s5 + $0x2bc] sm:$0xff]
    %v1071 = vld [vmem:[%s5 + $0x2c4] sm:$0xff]
    %v1072 = vld [vmem:[%s5 + $0x2cc] sm:$0xff]
    %v1073 = vld [vmem:[%s5 + $0x2d4] sm:$0xf]
    %v1074 = vld [vmem:[%s5 + $0x2d8] sm:$0xff]
    %v1075 = vld [vmem:[%s5 + $0x2e0] sm:$0xff]
    %v1076 = vld [vmem:[%s5 + $0x2e8] sm:$0xff]
    %v1077 = vld [vmem:[%s5 + $0x2f0] sm:$0xf]
    %v1078 = vld [vmem:[%s5 + $0x2f4] sm:$0xff]
    %v1079 = vld [vmem:[%s5 + $0x2fc] sm:$0xff]
    %v1080 = vld [vmem:[%s5 + $0x304] sm:$0xff]
    %v1081 = vld [vmem:[%s5 + $0x30c] sm:$0xf]
    %v1082 = vld [vmem:[%s5 + $0x310] sm:$0xff]
    %v1083 = vld [vmem:[%s5 + $0x318] sm:$0xff]
    %v1084 = vld [vmem:[%s5 + $0x320] sm:$0xff]
    %v1085 = vld [vmem:[%s5 + $0x328] sm:$0xf]
    %v1086 = vld [vmem:[%s5 + $0x32c] sm:$0xff]
    %v1087 = vld [vmem:[%s5 + $0x334] sm:$0xff]
    %v1088 = vld [vmem:[%s5 + $0x33c] sm:$0xff]
    %v1089 = vld [vmem:[%s5 + $0x344] sm:$0xf]
    %v1090 = vld [vmem:[%s5 + $0x348] sm:$0xff]
    %v1091 = vld [vmem:[%s5 + $0x350] sm:$0xff]
    %v1092 = vld [vmem:[%s5 + $0x358] sm:$0xff]
    %v1093 = vld [vmem:[%s5 + $0x360] sm:$0xf]
    %v1094 = vld [vmem:[%s5 + $0x364] sm:$0xff]
    %v1095 = vld [vmem:[%s5 + $0x36c] sm:$0xff]
    %v1096 = vld [vmem:[%s5 + $0x374] sm:$0xff]
    %v1097 = vld [vmem:[%s5 + $0x37c] sm:$0xf]
    %v1098 = vld [vmem:[%s6] sm:$0x7f]
    %v1100 = vlaneseq
    %v1101 = vshrl.u32 %v1100, 7
    %v1102 = vsub.s32 0, %v1101
    %v1103 = vrot.slane %v1098, %v1102
    %v1104 = vlaneseq
    %v1105 = vshrl.u32 %v1104, 7
    %v1106 = vsub.s32 1, %v1105
    %v1107 = vrot.slane %v1098, %v1106
    %v1108 = vlaneseq
    %v1109 = vshrl.u32 %v1108, 7
    %v1110 = vsub.s32 2, %v1109
    %v1111 = vrot.slane %v1098, %v1110
    %v1112 = vlaneseq
    %v1113 = vshrl.u32 %v1112, 7
    %v1114 = vsub.s32 3, %v1113
    %v1115 = vrot.slane %v1098, %v1114
    %v1116 = vlaneseq
    %v1117 = vshrl.u32 %v1116, 7
    %v1118 = vsub.s32 4, %v1117
    %v1119 = vrot.slane %v1098, %v1118
    %v1120 = vlaneseq
    %v1121 = vshrl.u32 %v1120, 7
    %v1122 = vsub.s32 5, %v1121
    %v1123 = vrot.slane %v1098, %v1122
    %v1124 = vlaneseq
    %v1125 = vshrl.u32 %v1124, 7
    %v1126 = vsub.s32 6, %v1125
    %v1127 = vrot.slane %v1098, %v1126
    %v1263 = vunpack.c.l.b16 %v970
    %v1264 = vunpack.c.h.b16 %v970
    %v1265 = vunpack.c.l.b16 %v971
    %v1266 = vunpack.c.h.b16 %v971
    %v1267 = vunpack.c.l.b16 %v972
    %v1268 = vunpack.c.h.b16 %v972
    %v1269 = vunpack.c.l.b16 %v973
    %v1270 = vunpack.c.l.b16 %v974
    %v1271 = vunpack.c.h.b16 %v974
    %v1272 = vunpack.c.l.b16 %v975
    %v1273 = vunpack.c.h.b16 %v975
    %v1274 = vunpack.c.l.b16 %v976
    %v1275 = vunpack.c.h.b16 %v976
    %v1276 = vunpack.c.l.b16 %v977
    %v1277 = vunpack.c.l.b16 %v978
    %v1278 = vunpack.c.h.b16 %v978
    %v1279 = vunpack.c.l.b16 %v979
    %v1280 = vunpack.c.h.b16 %v979
    %v1281 = vunpack.c.l.b16 %v980
    %v1282 = vunpack.c.h.b16 %v980
    %v1283 = vunpack.c.l.b16 %v981
    %v1284 = vunpack.c.l.b16 %v982
    %v1285 = vunpack.c.h.b16 %v982
    %v1286 = vunpack.c.l.b16 %v983
    %v1287 = vunpack.c.h.b16 %v983
    %v1288 = vunpack.c.l.b16 %v984
    %v1289 = vunpack.c.h.b16 %v984
    %v1290 = vunpack.c.l.b16 %v985
    %v1291 = vunpack.c.l.b16 %v986
    %v1292 = vunpack.c.h.b16 %v986
    %v1293 = vunpack.c.l.b16 %v987
    %v1294 = vunpack.c.h.b16 %v987
    %v1295 = vunpack.c.l.b16 %v988
    %v1296 = vunpack.c.h.b16 %v988
    %v1297 = vunpack.c.l.b16 %v989
    %v1298 = vunpack.c.l.b16 %v990
    %v1299 = vunpack.c.h.b16 %v990
    %v1300 = vunpack.c.l.b16 %v991
    %v1301 = vunpack.c.h.b16 %v991
    %v1302 = vunpack.c.l.b16 %v992
    %v1303 = vunpack.c.h.b16 %v992
    %v1304 = vunpack.c.l.b16 %v993
    %v1305 = vunpack.c.l.b16 %v994
    %v1306 = vunpack.c.h.b16 %v994
    %v1307 = vunpack.c.l.b16 %v995
    %v1308 = vunpack.c.h.b16 %v995
    %v1309 = vunpack.c.l.b16 %v996
    %v1310 = vunpack.c.h.b16 %v996
    %v1311 = vunpack.c.l.b16 %v997
    %v1312 = vunpack.c.l.b16 %v998
    %v1313 = vunpack.c.h.b16 %v998
    %v1314 = vunpack.c.l.b16 %v999
    %v1315 = vunpack.c.h.b16 %v999
    %v1316 = vunpack.c.l.b16 %v1000
    %v1317 = vunpack.c.h.b16 %v1000
    %v1318 = vunpack.c.l.b16 %v1001
    %v1319 = vunpack.c.l.b16 %v1002
    %v1320 = vunpack.c.h.b16 %v1002
    %v1321 = vunpack.c.l.b16 %v1003
    %v1322 = vunpack.c.h.b16 %v1003
    %v1323 = vunpack.c.l.b16 %v1004
    %v1324 = vunpack.c.h.b16 %v1004
    %v1325 = vunpack.c.l.b16 %v1005
    %v1326 = vunpack.c.l.b16 %v1006
    %v1327 = vunpack.c.h.b16 %v1006
    %v1328 = vunpack.c.l.b16 %v1007
    %v1329 = vunpack.c.h.b16 %v1007
    %v1330 = vunpack.c.l.b16 %v1008
    %v1331 = vunpack.c.h.b16 %v1008
    %v1332 = vunpack.c.l.b16 %v1009
    %v1333 = vunpack.c.l.b16 %v1010
    %v1334 = vunpack.c.h.b16 %v1010
    %v1335 = vunpack.c.l.b16 %v1011
    %v1336 = vunpack.c.h.b16 %v1011
    %v1337 = vunpack.c.l.b16 %v1012
    %v1338 = vunpack.c.h.b16 %v1012
    %v1339 = vunpack.c.l.b16 %v1013
    %v1340 = vunpack.c.l.b16 %v1014
    %v1341 = vunpack.c.h.b16 %v1014
    %v1342 = vunpack.c.l.b16 %v1015
    %v1343 = vunpack.c.h.b16 %v1015
    %v1344 = vunpack.c.l.b16 %v1016
    %v1345 = vunpack.c.h.b16 %v1016
    %v1346 = vunpack.c.l.b16 %v1017
    %v1347 = vunpack.c.l.b16 %v1018
    %v1348 = vunpack.c.h.b16 %v1018
    %v1349 = vunpack.c.l.b16 %v1019
    %v1350 = vunpack.c.h.b16 %v1019
    %v1351 = vunpack.c.l.b16 %v1020
    %v1352 = vunpack.c.h.b16 %v1020
    %v1353 = vunpack.c.l.b16 %v1021
    %v1354 = vunpack.c.l.b16 %v1022
    %v1355 = vunpack.c.h.b16 %v1022
    %v1356 = vunpack.c.l.b16 %v1023
    %v1357 = vunpack.c.h.b16 %v1023
    %v1358 = vunpack.c.l.b16 %v1024
    %v1359 = vunpack.c.h.b16 %v1024
    %v1360 = vunpack.c.l.b16 %v1025
    %v1361 = vunpack.c.l.b16 %v1026
    %v1362 = vunpack.c.h.b16 %v1026
    %v1363 = vunpack.c.l.b16 %v1027
    %v1364 = vunpack.c.h.b16 %v1027
    %v1365 = vunpack.c.l.b16 %v1028
    %v1366 = vunpack.c.h.b16 %v1028
    %v1367 = vunpack.c.l.b16 %v1029
    %v1368 = vunpack.c.l.b16 %v1030
    %v1369 = vunpack.c.h.b16 %v1030
    %v1370 = vunpack.c.l.b16 %v1031
    %v1371 = vunpack.c.h.b16 %v1031
    %v1372 = vunpack.c.l.b16 %v1032
    %v1373 = vunpack.c.h.b16 %v1032
    %v1374 = vunpack.c.l.b16 %v1033
    %v1375 = vunpack.c.l.b16 %v1034
    %v1376 = vunpack.c.h.b16 %v1034
    %v1377 = vunpack.c.l.b16 %v1035
    %v1378 = vunpack.c.h.b16 %v1035
    %v1379 = vunpack.c.l.b16 %v1036
    %v1380 = vunpack.c.h.b16 %v1036
    %v1381 = vunpack.c.l.b16 %v1037
    %v1382 = vunpack.c.l.b16 %v1038
    %v1383 = vunpack.c.h.b16 %v1038
    %v1384 = vunpack.c.l.b16 %v1039
    %v1385 = vunpack.c.h.b16 %v1039
    %v1386 = vunpack.c.l.b16 %v1040
    %v1387 = vunpack.c.h.b16 %v1040
    %v1388 = vunpack.c.l.b16 %v1041
    %v1389 = vunpack.c.l.b16 %v1042
    %v1390 = vunpack.c.h.b16 %v1042
    %v1391 = vunpack.c.l.b16 %v1043
    %v1392 = vunpack.c.h.b16 %v1043
    %v1393 = vunpack.c.l.b16 %v1044
    %v1394 = vunpack.c.h.b16 %v1044
    %v1395 = vunpack.c.l.b16 %v1045
    %v1396 = vunpack.c.l.b16 %v1046
    %v1397 = vunpack.c.h.b16 %v1046
    %v1398 = vunpack.c.l.b16 %v1047
    %v1399 = vunpack.c.h.b16 %v1047
    %v1400 = vunpack.c.l.b16 %v1048
    %v1401 = vunpack.c.h.b16 %v1048
    %v1402 = vunpack.c.l.b16 %v1049
    %v1403 = vunpack.c.l.b16 %v1050
    %v1404 = vunpack.c.h.b16 %v1050
    %v1405 = vunpack.c.l.b16 %v1051
    %v1406 = vunpack.c.h.b16 %v1051
    %v1407 = vunpack.c.l.b16 %v1052
    %v1408 = vunpack.c.h.b16 %v1052
    %v1409 = vunpack.c.l.b16 %v1053
    %v1410 = vunpack.c.l.b16 %v1054
    %v1411 = vunpack.c.h.b16 %v1054
    %v1412 = vunpack.c.l.b16 %v1055
    %v1413 = vunpack.c.h.b16 %v1055
    %v1414 = vunpack.c.l.b16 %v1056
    %v1415 = vunpack.c.h.b16 %v1056
    %v1416 = vunpack.c.l.b16 %v1057
    %v1417 = vunpack.c.l.b16 %v1058
    %v1418 = vunpack.c.h.b16 %v1058
    %v1419 = vunpack.c.l.b16 %v1059
    %v1420 = vunpack.c.h.b16 %v1059
    %v1421 = vunpack.c.l.b16 %v1060
    %v1422 = vunpack.c.h.b16 %v1060
    %v1423 = vunpack.c.l.b16 %v1061
    %v1424 = vunpack.c.l.b16 %v1062
    %v1425 = vunpack.c.h.b16 %v1062
    %v1426 = vunpack.c.l.b16 %v1063
    %v1427 = vunpack.c.h.b16 %v1063
    %v1428 = vunpack.c.l.b16 %v1064
    %v1429 = vunpack.c.h.b16 %v1064
    %v1430 = vunpack.c.l.b16 %v1065
    %v1431 = vunpack.c.l.b16 %v1066
    %v1432 = vunpack.c.h.b16 %v1066
    %v1433 = vunpack.c.l.b16 %v1067
    %v1434 = vunpack.c.h.b16 %v1067
    %v1435 = vunpack.c.l.b16 %v1068
    %v1436 = vunpack.c.h.b16 %v1068
    %v1437 = vunpack.c.l.b16 %v1069
    %v1438 = vunpack.c.l.b16 %v1070
    %v1439 = vunpack.c.h.b16 %v1070
    %v1440 = vunpack.c.l.b16 %v1071
    %v1441 = vunpack.c.h.b16 %v1071
    %v1442 = vunpack.c.l.b16 %v1072
    %v1443 = vunpack.c.h.b16 %v1072
    %v1444 = vunpack.c.l.b16 %v1073
    %v1445 = vunpack.c.l.b16 %v1074
    %v1446 = vunpack.c.h.b16 %v1074
    %v1447 = vunpack.c.l.b16 %v1075
    %v1448 = vunpack.c.h.b16 %v1075
    %v1449 = vunpack.c.l.b16 %v1076
    %v1450 = vunpack.c.h.b16 %v1076
    %v1451 = vunpack.c.l.b16 %v1077
    %v1452 = vunpack.c.l.b16 %v1078
    %v1453 = vunpack.c.h.b16 %v1078
    %v1454 = vunpack.c.l.b16 %v1079
    %v1455 = vunpack.c.h.b16 %v1079
    %v1456 = vunpack.c.l.b16 %v1080
    %v1457 = vunpack.c.h.b16 %v1080
    %v1458 = vunpack.c.l.b16 %v1081
    %v1459 = vunpack.c.l.b16 %v1082
    %v1460 = vunpack.c.h.b16 %v1082
    %v1461 = vunpack.c.l.b16 %v1083
    %v1462 = vunpack.c.h.b16 %v1083
    %v1463 = vunpack.c.l.b16 %v1084
    %v1464 = vunpack.c.h.b16 %v1084
    %v1465 = vunpack.c.l.b16 %v1085
    %v1466 = vunpack.c.l.b16 %v1086
    %v1467 = vunpack.c.h.b16 %v1086
    %v1468 = vunpack.c.l.b16 %v1087
    %v1469 = vunpack.c.h.b16 %v1087
    %v1470 = vunpack.c.l.b16 %v1088
    %v1471 = vunpack.c.h.b16 %v1088
    %v1472 = vunpack.c.l.b16 %v1089
    %v1473 = vunpack.c.l.b16 %v1090
    %v1474 = vunpack.c.h.b16 %v1090
    %v1475 = vunpack.c.l.b16 %v1091
    %v1476 = vunpack.c.h.b16 %v1091
    %v1477 = vunpack.c.l.b16 %v1092
    %v1478 = vunpack.c.h.b16 %v1092
    %v1479 = vunpack.c.l.b16 %v1093
    %v1480 = vunpack.c.l.b16 %v1094
    %v1481 = vunpack.c.h.b16 %v1094
    %v1482 = vunpack.c.l.b16 %v1095
    %v1483 = vunpack.c.h.b16 %v1095
    %v1484 = vunpack.c.l.b16 %v1096
    %v1485 = vunpack.c.h.b16 %v1096
    %v1486 = vunpack.c.l.b16 %v1097
    %v1487 = vpack.c.b16 %v1270, %v1263
    %v1488 = vpack.c.b16 %v1271, %v1264
    %v1489 = vpack.c.b16 %v1272, %v1265
    %v1490 = vpack.c.b16 %v1273, %v1266
    %v1491 = vpack.c.b16 %v1274, %v1267
    %v1492 = vpack.c.b16 %v1275, %v1268
    %v1493 = vpack.c.b16 %v1276, %v1269
    %v1494 = vpack.c.b16 %v1284, %v1277
    %v1495 = vpack.c.b16 %v1285, %v1278
    %v1496 = vpack.c.b16 %v1286, %v1279
    %v1497 = vpack.c.b16 %v1287, %v1280
    %v1498 = vpack.c.b16 %v1288, %v1281
    %v1499 = vpack.c.b16 %v1289, %v1282
    %v1500 = vpack.c.b16 %v1290, %v1283
    %v1501 = vpack.c.b16 %v1298, %v1291
    %v1502 = vpack.c.b16 %v1299, %v1292
    %v1503 = vpack.c.b16 %v1300, %v1293
    %v1504 = vpack.c.b16 %v1301, %v1294
    %v1505 = vpack.c.b16 %v1302, %v1295
    %v1506 = vpack.c.b16 %v1303, %v1296
    %v1507 = vpack.c.b16 %v1304, %v1297
    %v1508 = vpack.c.b16 %v1312, %v1305
    %v1509 = vpack.c.b16 %v1313, %v1306
    %v1510 = vpack.c.b16 %v1314, %v1307
    %v1511 = vpack.c.b16 %v1315, %v1308
    %v1512 = vpack.c.b16 %v1316, %v1309
    %v1513 = vpack.c.b16 %v1317, %v1310
    %v1514 = vpack.c.b16 %v1318, %v1311
    %v1515 = vpack.c.b16 %v1326, %v1319
    %v1516 = vpack.c.b16 %v1327, %v1320
    %v1517 = vpack.c.b16 %v1328, %v1321
    %v1518 = vpack.c.b16 %v1329, %v1322
    %v1519 = vpack.c.b16 %v1330, %v1323
    %v1520 = vpack.c.b16 %v1331, %v1324
    %v1521 = vpack.c.b16 %v1332, %v1325
    %v1522 = vpack.c.b16 %v1340, %v1333
    %v1523 = vpack.c.b16 %v1341, %v1334
    %v1524 = vpack.c.b16 %v1342, %v1335
    %v1525 = vpack.c.b16 %v1343, %v1336
    %v1526 = vpack.c.b16 %v1344, %v1337
    %v1527 = vpack.c.b16 %v1345, %v1338
    %v1528 = vpack.c.b16 %v1346, %v1339
    %v1529 = vpack.c.b16 %v1354, %v1347
    %v1530 = vpack.c.b16 %v1355, %v1348
    %v1531 = vpack.c.b16 %v1356, %v1349
    %v1532 = vpack.c.b16 %v1357, %v1350
    %v1533 = vpack.c.b16 %v1358, %v1351
    %v1534 = vpack.c.b16 %v1359, %v1352
    %v1535 = vpack.c.b16 %v1360, %v1353
    %v1536 = vpack.c.b16 %v1368, %v1361
    %v1537 = vpack.c.b16 %v1369, %v1362
    %v1538 = vpack.c.b16 %v1370, %v1363
    %v1539 = vpack.c.b16 %v1371, %v1364
    %v1540 = vpack.c.b16 %v1372, %v1365
    %v1541 = vpack.c.b16 %v1373, %v1366
    %v1542 = vpack.c.b16 %v1374, %v1367
    %v1543 = vpack.c.b16 %v1382, %v1375
    %v1544 = vpack.c.b16 %v1383, %v1376
    %v1545 = vpack.c.b16 %v1384, %v1377
    %v1546 = vpack.c.b16 %v1385, %v1378
    %v1547 = vpack.c.b16 %v1386, %v1379
    %v1548 = vpack.c.b16 %v1387, %v1380
    %v1549 = vpack.c.b16 %v1388, %v1381
    %v1550 = vpack.c.b16 %v1396, %v1389
    %v1551 = vpack.c.b16 %v1397, %v1390
    %v1552 = vpack.c.b16 %v1398, %v1391
    %v1553 = vpack.c.b16 %v1399, %v1392
    %v1554 = vpack.c.b16 %v1400, %v1393
    %v1555 = vpack.c.b16 %v1401, %v1394
    %v1556 = vpack.c.b16 %v1402, %v1395
    %v1557 = vpack.c.b16 %v1410, %v1403
    %v1558 = vpack.c.b16 %v1411, %v1404
    %v1559 = vpack.c.b16 %v1412, %v1405
    %v1560 = vpack.c.b16 %v1413, %v1406
    %v1561 = vpack.c.b16 %v1414, %v1407
    %v1562 = vpack.c.b16 %v1415, %v1408
    %v1563 = vpack.c.b16 %v1416, %v1409
    %v1564 = vpack.c.b16 %v1424, %v1417
    %v1565 = vpack.c.b16 %v1425, %v1418
    %v1566 = vpack.c.b16 %v1426, %v1419
    %v1567 = vpack.c.b16 %v1427, %v1420
    %v1568 = vpack.c.b16 %v1428, %v1421
    %v1569 = vpack.c.b16 %v1429, %v1422
    %v1570 = vpack.c.b16 %v1430, %v1423
    %v1571 = vpack.c.b16 %v1438, %v1431
    %v1572 = vpack.c.b16 %v1439, %v1432
    %v1573 = vpack.c.b16 %v1440, %v1433
    %v1574 = vpack.c.b16 %v1441, %v1434
    %v1575 = vpack.c.b16 %v1442, %v1435
    %v1576 = vpack.c.b16 %v1443, %v1436
    %v1577 = vpack.c.b16 %v1444, %v1437
    %v1578 = vpack.c.b16 %v1452, %v1445
    %v1579 = vpack.c.b16 %v1453, %v1446
    %v1580 = vpack.c.b16 %v1454, %v1447
    %v1581 = vpack.c.b16 %v1455, %v1448
    %v1582 = vpack.c.b16 %v1456, %v1449
    %v1583 = vpack.c.b16 %v1457, %v1450
    %v1584 = vpack.c.b16 %v1458, %v1451
    %v1585 = vpack.c.b16 %v1466, %v1459
    %v1586 = vpack.c.b16 %v1467, %v1460
    %v1587 = vpack.c.b16 %v1468, %v1461
    %v1588 = vpack.c.b16 %v1469, %v1462
    %v1589 = vpack.c.b16 %v1470, %v1463
    %v1590 = vpack.c.b16 %v1471, %v1464
    %v1591 = vpack.c.b16 %v1472, %v1465
    %v1592 = vpack.c.b16 %v1480, %v1473
    %v1593 = vpack.c.b16 %v1481, %v1474
    %v1594 = vpack.c.b16 %v1482, %v1475
    %v1595 = vpack.c.b16 %v1483, %v1476
    %v1596 = vpack.c.b16 %v1484, %v1477
    %v1597 = vpack.c.b16 %v1485, %v1478
    %v1598 = vpack.c.b16 %v1486, %v1479
    %1711 = vmatprep.subr.bf16.mxu0 %v1488
    %1712 = vmatpush1.bf16.msra.mxu0 %v1487
    %1713 = vmatprep.subr.bf16.mxu0 %v1495
    %1714 = vmatpush1.bf16.msra.mxu0 %v1494
    %1715 = vmatprep.subr.bf16.mxu0 %v1502
    %1716 = vmatpush1.bf16.msra.mxu0 %v1501
    %1717 = vmatprep.subr.bf16.mxu0 %v1509
    %1718 = vmatpush1.bf16.msra.mxu0 %v1508
    %1719 = vmatprep.subr.bf16.mxu0 %v1516
    %1720 = vmatpush1.bf16.msra.mxu0 %v1515
    %1721 = vmatprep.subr.bf16.mxu0 %v1523
    %1722 = vmatpush1.bf16.msra.mxu0 %v1522
    %1723 = vmatprep.subr.bf16.mxu0 %v1530
    %1724 = vmatpush1.bf16.msra.mxu0 %v1529
    %1725 = vmatprep.subr.bf16.mxu0 %v1537
    %1726 = vmatpush1.bf16.msra.mxu0 %v1536
    %1727 = vmatprep.subr.bf16.mxu0 %v1544
    %1728 = vmatpush1.bf16.msra.mxu0 %v1543
    %1729 = vmatprep.subr.bf16.mxu0 %v1551
    %1730 = vmatpush1.bf16.msra.mxu0 %v1550
    %1731 = vmatprep.subr.bf16.mxu0 %v1558
    %1732 = vmatpush1.bf16.msra.mxu0 %v1557
    %1733 = vmatprep.subr.bf16.mxu0 %v1565
    %1734 = vmatpush1.bf16.msra.mxu0 %v1564
    %1735 = vmatprep.subr.bf16.mxu0 %v1572
    %1736 = vmatpush1.bf16.msra.mxu0 %v1571
    %1737 = vmatprep.subr.bf16.mxu0 %v1579
    %1738 = vmatpush1.bf16.msra.mxu0 %v1578
    %1739 = vmatprep.subr.bf16.mxu0 %v1586
    %1740 = vmatpush1.bf16.msra.mxu0 %v1585
    %1741 = vmatprep.subr.bf16.mxu0 %v1593
    %1742 = vmatpush1.bf16.msra.mxu0 %v1592
    %1743 = vmatprep.mubr.bf16.mxu0 %v969
    %1744 = vmatmul.mubr.bf16.gmra.mrb[0].mxu0 %v968
    %v1745 = vpop.f32.mrb[0].mxu0
    %v1746 = vadd.f32 %v1103, %v1745
    %v1747 = vpop.f32.mrb[0].mxu0
    %v1748 = vadd.f32 %v1107, %v1747
    %v1749 = vpop.f32.mrb[0].mxu0
    %v1750 = vadd.f32 %v1103, %v1749
    %v1751 = vpop.f32.mrb[0].mxu0
    %v1752 = vadd.f32 %v1107, %v1751
    %1753 = vdwg.mxu0
    %1754 = vmatprep.subr.bf16.mxu0 %v1490
    %1755 = vmatpush1.bf16.msra.mxu0 %v1489
    %1756 = vmatprep.subr.bf16.mxu0 %v1497
    %1757 = vmatpush1.bf16.msra.mxu0 %v1496
    %1758 = vmatprep.subr.bf16.mxu0 %v1504
    %1759 = vmatpush1.bf16.msra.mxu0 %v1503
    %1760 = vmatprep.subr.bf16.mxu0 %v1511
    %1761 = vmatpush1.bf16.msra.mxu0 %v1510
    %1762 = vmatprep.subr.bf16.mxu0 %v1518
    %1763 = vmatpush1.bf16.msra.mxu0 %v1517
    %1764 = vmatprep.subr.bf16.mxu0 %v1525
    %1765 = vmatpush1.bf16.msra.mxu0 %v1524
    %1766 = vmatprep.subr.bf16.mxu0 %v1532
    %1767 = vmatpush1.bf16.msra.mxu0 %v1531
    %1768 = vmatprep.subr.bf16.mxu0 %v1539
    %1769 = vmatpush1.bf16.msra.mxu0 %v1538
    %1770 = vmatprep.subr.bf16.mxu0 %v1546
    %1771 = vmatpush1.bf16.msra.mxu0 %v1545
    %1772 = vmatprep.subr.bf16.mxu0 %v1553
    %1773 = vmatpush1.bf16.msra.mxu0 %v1552
    %1774 = vmatprep.subr.bf16.mxu0 %v1560
    %1775 = vmatpush1.bf16.msra.mxu0 %v1559
    %1776 = vmatprep.subr.bf16.mxu0 %v1567
    %1777 = vmatpush1.bf16.msra.mxu0 %v1566
    %1778 = vmatprep.subr.bf16.mxu0 %v1574
    %1779 = vmatpush1.bf16.msra.mxu0 %v1573
    %1780 = vmatprep.subr.bf16.mxu0 %v1581
    %1781 = vmatpush1.bf16.msra.mxu0 %v1580
    %1782 = vmatprep.subr.bf16.mxu0 %v1588
    %1783 = vmatpush1.bf16.msra.mxu0 %v1587
    %1784 = vmatprep.subr.bf16.mxu0 %v1595
    %1785 = vmatpush1.bf16.msra.mxu0 %v1594
    %1786 = vmatprep.mubr.bf16.mxu0 %v969
    %1787 = vmatmul.mubr.bf16.gmra.mrb[0].mxu0 %v968
    %v1788 = vpop.f32.mrb[0].mxu0
    %v1789 = vadd.f32 %v1111, %v1788
    %v1790 = vpop.f32.mrb[0].mxu0
    %v1791 = vadd.f32 %v1115, %v1790
    %v1792 = vpop.f32.mrb[0].mxu0
    %v1793 = vadd.f32 %v1111, %v1792
    %v1794 = vpop.f32.mrb[0].mxu0
    %v1795 = vadd.f32 %v1115, %v1794
    %1796 = vdwg.mxu0
    %1797 = vmatprep.subr.bf16.mxu0 %v1492
    %1798 = vmatpush1.bf16.msra.mxu0 %v1491
    %1799 = vmatprep.subr.bf16.mxu0 %v1499
    %1800 = vmatpush1.bf16.msra.mxu0 %v1498
    %1801 = vmatprep.subr.bf16.mxu0 %v1506
    %1802 = vmatpush1.bf16.msra.mxu0 %v1505
    %1803 = vmatprep.subr.bf16.mxu0 %v1513
    %1804 = vmatpush1.bf16.msra.mxu0 %v1512
    %1805 = vmatprep.subr.bf16.mxu0 %v1520
    %1806 = vmatpush1.bf16.msra.mxu0 %v1519
    %1807 = vmatprep.subr.bf16.mxu0 %v1527
    %1808 = vmatpush1.bf16.msra.mxu0 %v1526
    %1809 = vmatprep.subr.bf16.mxu0 %v1534
    %1810 = vmatpush1.bf16.msra.mxu0 %v1533
    %1811 = vmatprep.subr.bf16.mxu0 %v1541
    %1812 = vmatpush1.bf16.msra.mxu0 %v1540
    %1813 = vmatprep.subr.bf16.mxu0 %v1548
    %1814 = vmatpush1.bf16.msra.mxu0 %v1547
    %1815 = vmatprep.subr.bf16.mxu0 %v1555
    %1816 = vmatpush1.bf16.msra.mxu0 %v1554
    %1817 = vmatprep.subr.bf16.mxu0 %v1562
    %1818 = vmatpush1.bf16.msra.mxu0 %v1561
    %1819 = vmatprep.subr.bf16.mxu0 %v1569
    %1820 = vmatpush1.bf16.msra.mxu0 %v1568
    %1821 = vmatprep.subr.bf16.mxu0 %v1576
    %1822 = vmatpush1.bf16.msra.mxu0 %v1575
    %1823 = vmatprep.subr.bf16.mxu0 %v1583
    %1824 = vmatpush1.bf16.msra.mxu0 %v1582
    %1825 = vmatprep.subr.bf16.mxu0 %v1590
    %1826 = vmatpush1.bf16.msra.mxu0 %v1589
    %1827 = vmatprep.subr.bf16.mxu0 %v1597
    %1828 = vmatpush1.bf16.msra.mxu0 %v1596
    %1829 = vmatprep.mubr.bf16.mxu0 %v969
    %1830 = vmatmul.mubr.bf16.gmra.mrb[0].mxu0 %v968
    %v1831 = vpop.f32.mrb[0].mxu0
    %v1832 = vadd.f32 %v1119, %v1831
    %v1833 = vpop.f32.mrb[0].mxu0
    %v1834 = vadd.f32 %v1123, %v1833
    %v1835 = vpop.f32.mrb[0].mxu0
    %v1836 = vadd.f32 %v1119, %v1835
    %v1837 = vpop.f32.mrb[0].mxu0
    %v1838 = vadd.f32 %v1123, %v1837
    %1839 = vdwg.mxu0
    %1840 = vmatprep.subr.bf16.mxu0 0
    %1841 = vmatpush1.bf16.msra.mxu0 %v1493
    %1842 = vmatprep.subr.bf16.mxu0 0
    %1843 = vmatpush1.bf16.msra.mxu0 %v1500
    %1844 = vmatprep.subr.bf16.mxu0 0
    %1845 = vmatpush1.bf16.msra.mxu0 %v1507
    %1846 = vmatprep.subr.bf16.mxu0 0
    %1847 = vmatpush1.bf16.msra.mxu0 %v1514
    %1848 = vmatprep.subr.bf16.mxu0 0
    %1849 = vmatpush1.bf16.msra.mxu0 %v1521
    %1850 = vmatprep.subr.bf16.mxu0 0
    %1851 = vmatpush1.bf16.msra.mxu0 %v1528
    %1852 = vmatprep.subr.bf16.mxu0 0
    %1853 = vmatpush1.bf16.msra.mxu0 %v1535
    %1854 = vmatprep.subr.bf16.mxu0 0
    %1855 = vmatpush1.bf16.msra.mxu0 %v1542
    %1856 = vmatprep.subr.bf16.mxu0 0
    %1857 = vmatpush1.bf16.msra.mxu0 %v1549
    %1858 = vmatprep.subr.bf16.mxu0 0
    %1859 = vmatpush1.bf16.msra.mxu0 %v1556
    %1860 = vmatprep.subr.bf16.mxu0 0
    %1861 = vmatpush1.bf16.msra.mxu0 %v1563
    %1862 = vmatprep.subr.bf16.mxu0 0
    %1863 = vmatpush1.bf16.msra.mxu0 %v1570
    %1864 = vmatprep.subr.bf16.mxu0 0
    %1865 = vmatpush1.bf16.msra.mxu0 %v1577
    %1866 = vmatprep.subr.bf16.mxu0 0
    %1867 = vmatpush1.bf16.msra.mxu0 %v1584
    %1868 = vmatprep.subr.bf16.mxu0 0
    %1869 = vmatpush1.bf16.msra.mxu0 %v1591
    %1870 = vmatprep.subr.bf16.mxu0 0
    %1871 = vmatpush1.bf16.msra.mxu0 %v1598
    %1872 = vmatprep.mubr.bf16.mxu0 %v969
    %1873 = vmatmul.mubr.bf16.gmra.mrb[0].mxu0 %v968
    %v1874 = vpop.f32.mrb[0].mxu0
    %v1875 = vadd.f32 %v1127, %v1874
    %v1876 = vpop.f32.mrb[0].mxu0
    %v1877 = vpop.f32.mrb[0].mxu0
    %v1878 = vadd.f32 %v1127, %v1877
    %v1879 = vpop.f32.mrb[0].mxu0
    %1880 = vdwg.mxu0
    %v1881 = vsub.f32 %v58, %v1746
    %v1882 = vsub.f32 %v59, %v1748
    %v1883 = vsub.f32 %v60, %v1789
    %v1884 = vsub.f32 %v61, %v1791
    %v1885 = vsub.f32 %v62, %v1832
    %v1886 = vsub.f32 %v63, %v1834
    %v1887 = vsub.f32 %v64, %v1875
    %v1888 = vsub.f32 %v65, %v1750
    %v1889 = vsub.f32 %v66, %v1752
    %v1890 = vsub.f32 %v67, %v1793
    %v1891 = vsub.f32 %v68, %v1795
    %v1892 = vsub.f32 %v69, %v1836
    %v1893 = vsub.f32 %v70, %v1838
    %v1894 = vsub.f32 %v71, %v1878
    %p1895 = scmp.ne.s32.totalorder 0, 0
    // Predicated region
    $region30: #{tpu_custom_call.1} parent=1 // pred_check
      %p1896 = pneg %p1895
    $region31: #{tpu_custom_call.1} parent=1 // pred_check_branch
      %1898 = sbr.rel (%p1896) target = $region33
    $region32: #{tpu_custom_call.1} parent=1 // pred_region
      %v1899 = vmul.f32 %v1881, %v1881
      %v1900 = vmul.f32 %v1882, %v1882
      %v1901 = vmul.f32 %v1883, %v1883
      %v1902 = vmul.f32 %v1884, %v1884
      %v1903 = vmul.f32 %v1885, %v1885
      %v1904 = vmul.f32 %v1886, %v1886
      %v1905 = vmul.f32 %v1887, %v1887
      %v1906 = vmul.f32 %v1888, %v1888
      %v1907 = vmul.f32 %v1889, %v1889
      %v1908 = vmul.f32 %v1890, %v1890
      %v1909 = vmul.f32 %v1891, %v1891
      %v1910 = vmul.f32 %v1892, %v1892
      %v1911 = vmul.f32 %v1893, %v1893
      %v1912 = vmul.f32 %v1894, %v1894
      %v1913 = vadd.f32 %v1899, %v1906
      %v1914 = vrot.slane %v1913, 4
      %v1915 = vadd.f32 %v1913, %v1914
      %v1916 = vrot.slane %v1915, 2
      %v1917 = vadd.f32 %v1915, %v1916
      %v1918 = vrot.slane %v1917, 1
      %v1919 = vadd.f32 %v1917, %v1918
      %v1920 = vadd.f32 %v1900, %v1907
      %v1921 = vrot.slane %v1920, 4
      %v1922 = vadd.f32 %v1920, %v1921
      %v1923 = vrot.slane %v1922, 2
      %v1924 = vadd.f32 %v1922, %v1923
      %v1925 = vrot.slane %v1924, 1
      %v1926 = vadd.f32 %v1924, %v1925
      %v1927 = vadd.f32 %v1901, %v1908
      %v1928 = vrot.slane %v1927, 4
      %v1929 = vadd.f32 %v1927, %v1928
      %v1930 = vrot.slane %v1929, 2
      %v1931 = vadd.f32 %v1929, %v1930
      %v1932 = vrot.slane %v1931, 1
      %v1933 = vadd.f32 %v1931, %v1932
      %v1934 = vadd.f32 %v1902, %v1909
      %v1935 = vrot.slane %v1934, 4
      %v1936 = vadd.f32 %v1934, %v1935
      %v1937 = vrot.slane %v1936, 2
      %v1938 = vadd.f32 %v1936, %v1937
      %v1939 = vrot.slane %v1938, 1
      %v1940 = vadd.f32 %v1938, %v1939
      %v1941 = vadd.f32 %v1903, %v1910
      %v1942 = vrot.slane %v1941, 4
      %v1943 = vadd.f32 %v1941, %v1942
      %v1944 = vrot.slane %v1943, 2
      %v1945 = vadd.f32 %v1943, %v1944
      %v1946 = vrot.slane %v1945, 1
      %v1947 = vadd.f32 %v1945, %v1946
      %v1948 = vadd.f32 %v1904, %v1911
      %v1949 = vrot.slane %v1948, 4
      %v1950 = vadd.f32 %v1948, %v1949
      %v1951 = vrot.slane %v1950, 2
      %v1952 = vadd.f32 %v1950, %v1951
      %v1953 = vrot.slane %v1952, 1
      %v1954 = vadd.f32 %v1952, %v1953
      %v1955 = vsel %vm252, %v1905, 0.0
      %v1956 = vsel %vm252, %v1912, 0.0
      %v1957 = vadd.f32 %v1955, %v1956
      %v1958 = vrot.slane %v1957, 4
      %v1959 = vadd.f32 %v1957, %v1958
      %v1960 = vrot.slane %v1959, 2
      %v1961 = vadd.f32 %v1959, %v1960
      %v1962 = vrot.slane %v1961, 1
      %v1963 = vadd.f32 %v1961, %v1962
      %v1971 = vcombine.low %v1919, %v1926
      %v1972 = vcombine.low %v1933, %v1940
      %v1973 = vcombine.low %v1947, %v1954
      %v1975 = vunpack.c.l.s4 1966171168
      %v1976 = vunpack.c.0.s8 %v1975
      %v1977 = vlaneseq
      %v1978 = vshrl.u32 %v1977, 7
      %v1979 = vsub.s32 %v1976, %v1978
      %v1980 = vrot.slane %v1971, %v1979
      %v1982 = vunpack.c.l.s4 1966171168
      %v1983 = vunpack.c.0.s8 %v1982
      %v1984 = vlaneseq
      %v1985 = vshrl.u32 %v1984, 7
      %v1986 = vsub.s32 %v1983, %v1985
      %v1987 = vrot.slane %v1972, %v1986
      %v1989 = vunpack.c.l.s4 1966171168
      %v1990 = vunpack.c.0.s8 %v1989
      %v1991 = vlaneseq
      %v1992 = vshrl.u32 %v1991, 7
      %v1993 = vsub.s32 %v1990, %v1992
      %v1994 = vrot.slane %v1973, %v1993
      %v1996 = vunpack.c.l.s4 1966171168
      %v1997 = vunpack.c.0.s8 %v1996
      %v1998 = vlaneseq
      %v1999 = vshrl.u32 %v1998, 7
      %v2000 = vsub.s32 %v1997, %v1999
      %v2001 = vrot.slane %v1963, %v2000
      %v2002 = vcombine.low %v1980, %v1987
      %v2003 = vcombine.low %v1994, %v2001
      %v2005 = vunpack.c.l.s4 1966171168
      %v2006 = vunpack.c.0.s8 %v2005
      %v2007 = vlaneseq
      %v2008 = vshrl.u32 %v2007, 7
      %v2009 = vsub.s32 %v2006, %v2008
      %v2010 = vrot.slane %v2002, %v2009
      %v2012 = vunpack.c.l.s4 1966171168
      %v2013 = vunpack.c.0.s8 %v2012
      %v2014 = vlaneseq
      %v2015 = vshrl.u32 %v2014, 7
      %v2016 = vsub.s32 %v2013, %v2015
      %v2017 = vrot.slane %v2003, %v2016
      %v2018 = vcombine.low %v2010, %v2017
      %v2020 = vlaneseq
      %vm2021 = vcmp.ge.s32.totalorder %v2020, 0
      %vm2022 = vcmp.lt.s32.totalorder %v2020, 784
      %vm2023 = vmand %vm2021, %vm2022
      %2024 = vst.msk [vmem:[#allocation2] sm:$0x7f] %vm2023, %v2018
    $region33: #{tpu_custom_call.1} parent=1 // pred_fallthru
      _
    %p2025 = scmp.eq.s32.totalorder 0, 0
    // Predicated region
    $region34: #{tpu_custom_call.1} parent=1 // pred_check
      %p2026 = pneg %p2025
    $region35: #{tpu_custom_call.1} parent=1 // pred_check_branch
      %2028 = sbr.rel (%p2026) target = $region37
    $region36: #{tpu_custom_call.1} parent=1 // pred_region
      %2029 = vset.pattern.permute.xlu0 14
      %2030 = vperm.xlu0 %2029, %v72
      %v2031 = vpop.permute.xlu0 %2030
      %2033 = vset.pattern.permute.xlu0 14
      %2034 = vperm.xlu0 %2033, %v73
      %v2035 = vpop.permute.xlu0 %2034
      %v2037 = vmul.f32 %v1881, %v2031
      %v2038 = vmul.f32 %v1882, %v2031
      %v2039 = vmul.f32 %v1883, %v2031
      %v2040 = vmul.f32 %v1884, %v2031
      %v2041 = vmul.f32 %v1885, %v2031
      %v2042 = vmul.f32 %v1886, %v2031
      %v2043 = vmul.f32 %v1887, %v2031
      %v2044 = vmul.f32 %v1888, %v2035
      %v2045 = vmul.f32 %v1889, %v2035
      %v2046 = vmul.f32 %v1890, %v2035
      %v2047 = vmul.f32 %v1891, %v2035
      %v2048 = vmul.f32 %v1892, %v2035
      %v2049 = vmul.f32 %v1893, %v2035
      %v2050 = vmul.f32 %v1894, %v2035
      %v2051 = vmul.f32 %v2037, %v2037
      %v2052 = vmul.f32 %v2038, %v2038
      %v2053 = vmul.f32 %v2039, %v2039
      %v2054 = vmul.f32 %v2040, %v2040
      %v2055 = vmul.f32 %v2041, %v2041
      %v2056 = vmul.f32 %v2042, %v2042
      %v2057 = vmul.f32 %v2043, %v2043
      %v2058 = vmul.f32 %v2044, %v2044
      %v2059 = vmul.f32 %v2045, %v2045
      %v2060 = vmul.f32 %v2046, %v2046
      %v2061 = vmul.f32 %v2047, %v2047
      %v2062 = vmul.f32 %v2048, %v2048
      %v2063 = vmul.f32 %v2049, %v2049
      %v2064 = vmul.f32 %v2050, %v2050
      %v2065 = vadd.f32 %v2051, %v2058
      %v2066 = vrot.slane %v2065, 4
      %v2067 = vadd.f32 %v2065, %v2066
      %v2068 = vrot.slane %v2067, 2
      %v2069 = vadd.f32 %v2067, %v2068
      %v2070 = vrot.slane %v2069, 1
      %v2071 = vadd.f32 %v2069, %v2070
      %v2072 = vadd.f32 %v2052, %v2059
      %v2073 = vrot.slane %v2072, 4
      %v2074 = vadd.f32 %v2072, %v2073
      %v2075 = vrot.slane %v2074, 2
      %v2076 = vadd.f32 %v2074, %v2075
      %v2077 = vrot.slane %v2076, 1
      %v2078 = vadd.f32 %v2076, %v2077
      %v2079 = vadd.f32 %v2053, %v2060
      %v2080 = vrot.slane %v2079, 4
      %v2081 = vadd.f32 %v2079, %v2080
      %v2082 = vrot.slane %v2081, 2
      %v2083 = vadd.f32 %v2081, %v2082
      %v2084 = vrot.slane %v2083, 1
      %v2085 = vadd.f32 %v2083, %v2084
      %v2086 = vadd.f32 %v2054, %v2061
      %v2087 = vrot.slane %v2086, 4
      %v2088 = vadd.f32 %v2086, %v2087
      %v2089 = vrot.slane %v2088, 2
      %v2090 = vadd.f32 %v2088, %v2089
      %v2091 = vrot.slane %v2090, 1
      %v2092 = vadd.f32 %v2090, %v2091
      %v2093 = vadd.f32 %v2055, %v2062
      %v2094 = vrot.slane %v2093, 4
      %v2095 = vadd.f32 %v2093, %v2094
      %v2096 = vrot.slane %v2095, 2
      %v2097 = vadd.f32 %v2095, %v2096
      %v2098 = vrot.slane %v2097, 1
      %v2099 = vadd.f32 %v2097, %v2098
      %v2100 = vadd.f32 %v2056, %v2063
      %v2101 = vrot.slane %v2100, 4
      %v2102 = vadd.f32 %v2100, %v2101
      %v2103 = vrot.slane %v2102, 2
      %v2104 = vadd.f32 %v2102, %v2103
      %v2105 = vrot.slane %v2104, 1
      %v2106 = vadd.f32 %v2104, %v2105
      %v2107 = vsel %vm252, %v2057, 0.0
      %v2108 = vsel %vm252, %v2064, 0.0
      %v2109 = vadd.f32 %v2107, %v2108
      %v2110 = vrot.slane %v2109, 4
      %v2111 = vadd.f32 %v2109, %v2110
      %v2112 = vrot.slane %v2111, 2
      %v2113 = vadd.f32 %v2111, %v2112
      %v2114 = vrot.slane %v2113, 1
      %v2115 = vadd.f32 %v2113, %v2114
      %v2123 = vcombine.low %v2071, %v2078
      %v2124 = vcombine.low %v2085, %v2092
      %v2125 = vcombine.low %v2099, %v2106
      %v2127 = vunpack.c.l.s4 1966171168
      %v2128 = vunpack.c.0.s8 %v2127
      %v2129 = vlaneseq
      %v2130 = vshrl.u32 %v2129, 7
      %v2131 = vsub.s32 %v2128, %v2130
      %v2132 = vrot.slane %v2123, %v2131
      %v2134 = vunpack.c.l.s4 1966171168
      %v2135 = vunpack.c.0.s8 %v2134
      %v2136 = vlaneseq
      %v2137 = vshrl.u32 %v2136, 7
      %v2138 = vsub.s32 %v2135, %v2137
      %v2139 = vrot.slane %v2124, %v2138
      %v2141 = vunpack.c.l.s4 1966171168
      %v2142 = vunpack.c.0.s8 %v2141
      %v2143 = vlaneseq
      %v2144 = vshrl.u32 %v2143, 7
      %v2145 = vsub.s32 %v2142, %v2144
      %v2146 = vrot.slane %v2125, %v2145
      %v2148 = vunpack.c.l.s4 1966171168
      %v2149 = vunpack.c.0.s8 %v2148
      %v2150 = vlaneseq
      %v2151 = vshrl.u32 %v2150, 7
      %v2152 = vsub.s32 %v2149, %v2151
      %v2153 = vrot.slane %v2115, %v2152
      %v2154 = vcombine.low %v2132, %v2139
      %v2155 = vcombine.low %v2146, %v2153
      %v2157 = vunpack.c.l.s4 1966171168
      %v2158 = vunpack.c.0.s8 %v2157
      %v2159 = vlaneseq
      %v2160 = vshrl.u32 %v2159, 7
      %v2161 = vsub.s32 %v2158, %v2160
      %v2162 = vrot.slane %v2154, %v2161
      %v2164 = vunpack.c.l.s4 1966171168
      %v2165 = vunpack.c.0.s8 %v2164
      %v2166 = vlaneseq
      %v2167 = vshrl.u32 %v2166, 7
      %v2168 = vsub.s32 %v2165, %v2167
      %v2169 = vrot.slane %v2155, %v2168
      %v2170 = vcombine.low %v2162, %v2169
      %v2172 = vlaneseq
      %vm2173 = vcmp.ge.s32.totalorder %v2172, 0
      %vm2174 = vcmp.lt.s32.totalorder %v2172, 784
      %vm2175 = vmand %vm2173, %vm2174
      %2176 = vst.msk [vmem:[#allocation2] sm:$0x7f] %vm2175, %v2170
    $region37: #{tpu_custom_call.1} parent=1 // pred_fallthru
      _
    // Predicated region
    $region38: #{tpu_custom_call.1} parent=1 // pred_check
      _
    $region39: #{tpu_custom_call.1} parent=1 // pred_check_branch
      %2178 = sbr.rel (0) target = $region41
    $region40: #{tpu_custom_call.1} parent=1 // pred_region
      %s2180 = ssub.s32 112, 112
      %2181 = vsyncadd [#allocation3], %s2180
      %s2183 = sshll.u32 [#allocation2], 4
      %s2184 = int_to_ptr.vmem [resolvable:$true] %s2183
      %2186 = dma.vmem_to_hbm [thread:$0]  %s2184, 112, %s7, [#allocation3]
    $region41: #{tpu_custom_call.1} parent=1 // pred_fallthru
      _
    // Predicated region
    $region42: #{tpu_custom_call.1} parent=1 // pred_check
      _
    $region43: #{tpu_custom_call.1} parent=1 // pred_check_branch
      %2188 = sbr.rel (0) target = $region45
    $region44: #{tpu_custom_call.1} parent=1 // pred_region
      %2189 = dma.done [#allocation3], 112
    $region45: #{tpu_custom_call.1} parent=1 // pred_fallthru
      _
    %2190 = vsyncpa [#allocation3], 1

</llo_original>
